<compile_context>
chip_gen: v7x
topology: tpu7x:2x2x1
jax: 0.10.0
libtpu: 0.0.40
codegen_flags: <defaults>
</compile_context>

<pallas_src>
import functools
import math

import jax
import jax.numpy as jnp
from jax.experimental import pallas as pl
from jax.experimental.pallas import tpu as pltpu


def _round_up(x, m):
    return (x + m - 1) // m * m


# --------------------------------------------------------------------------
# Linear (+ optional relu): y = x @ W + b, row tiled, bf16 MXU / f32 acc.
# Emits the requested dtype directly (bf16 for lin0 so the fused stack gets
# MXU-ready input without an extra XLA cast pass).
# --------------------------------------------------------------------------
def _linear_kernel(x_ref, w_ref, b_ref, o_ref, *, relu):
    y = jnp.dot(x_ref[...], w_ref[...], preferred_element_type=jnp.float32)
    y = y + b_ref[...]                       # f32 bias add
    if relu:
        y = jnp.maximum(y, 0.0)
    o_ref[...] = y.astype(o_ref.dtype)


def linear_pallas(x, w_t, b, *, relu, out_dtype=jnp.float32, tm=128):
    n, k = x.shape
    k2, h = w_t.shape
    assert k == k2
    kp = _round_up(k, 128)                   # lane-dense contraction dim
    hp = _round_up(h, 128)                   # lane-dense output dim
    n_pad = _round_up(n, tm)

    x_p = jnp.pad(x, ((0, n_pad - n), (0, kp - k))).astype(jnp.bfloat16)
    w_p = jnp.pad(w_t, ((0, kp - k), (0, hp - h))).astype(jnp.bfloat16)
    b_p = jnp.pad(b.reshape(1, -1), ((0, 0), (0, hp - h))).astype(jnp.float32)

    out_bytes = jnp.dtype(out_dtype).itemsize
    kern = functools.partial(_linear_kernel, relu=relu)
    out = pl.pallas_call(
        kern,
        out_shape=jax.ShapeDtypeStruct((n_pad, hp), out_dtype),
        grid=(n_pad // tm,),
        in_specs=[
            pl.BlockSpec((tm, kp), lambda i: (i, 0)),   # row tile of x
            pl.BlockSpec((kp, hp), lambda i: (0, 0)),   # W resident in VMEM
            pl.BlockSpec((1, hp), lambda i: (0, 0)),    # bias resident
        ],
        out_specs=pl.BlockSpec((tm, hp), lambda i: (i, 0)),
        compiler_params=pltpu.CompilerParams(
            dimension_semantics=("parallel",),
            vmem_limit_bytes=48 * 1024 * 1024,
        ),
        cost_estimate=pl.CostEstimate(
            flops=2 * n_pad * kp * hp,
            transcendentals=0,
            bytes_accessed=(n_pad * kp + kp * hp) * 2 + n_pad * hp * out_bytes,
        ),
    )(x_p, w_p, b_p)
    return out[:n, :h]


# --------------------------------------------------------------------------
# Fused GCN2Conv stack: grid = (layer, row_tile); activation ping-pongs in
# VMEM scratch across all layers; output written to HBM once via DMA.
# --------------------------------------------------------------------------
def _gcn2_stack_kernel(betas_ref, adj_ref, x0_ref, w_ref, o_ref,
                       x_pp, copy_sem, *, alpha, num_layers, tm, adj_resident):
    l = pl.program_id(0)            # layer axis (outermost, sequential)
    i = pl.program_id(1)            # row-tile axis (innermost, sequential)
    row0 = pl.multiple_of(i * tm, tm)

    # A_hat rows for this tile: either sliced from the VMEM-resident full
    # adjacency (no per-layer HBM re-read) or the streamed (tm, N) block.
    if adj_resident:
        adj_rows = adj_ref[pl.ds(row0, tm), :]
    else:
        adj_rows = adj_ref[...]

    beta = betas_ref[l]             # per-layer scalar from SMEM
    w = w_ref[...]                  # (H, H); layer dim squeezed by BlockSpec

    write_slot = (l + 1) % 2        # ping-pong parity

    def layer_body(x_prev_ref):
        # propagate: A_hat[rows, :] @ x_prev   (bf16 MXU, f32 accumulation)
        agg = jnp.dot(adj_rows, x_prev_ref[...],
                      preferred_element_type=jnp.float32)
        # initial residual (f32); x0 tile loaded right before use
        s = (1.0 - alpha) * agg \
            + alpha * x0_ref[pl.ds(row0, tm), :].astype(jnp.float32)
        # identity mapping (shared_weights=True): (1-beta)*s + beta*(s @ W_l)
        sw = jnp.dot(s.astype(jnp.bfloat16), w,
                     preferred_element_type=jnp.float32)
        h = (1.0 - beta) * s + beta * sw
        # outer residual + relu; x_prev tile loaded right before use
        new_x = jnp.maximum(
            h + x_prev_ref[pl.ds(row0, tm), :].astype(jnp.float32), 0.0)
        x_pp[write_slot, pl.ds(row0, tm), :] = new_x.astype(jnp.bfloat16)

    # Layer 0 propagates x0 directly (x == x0 at that point): no seed copy.
    @pl.when(l == 0)
    def _():
        layer_body(x0_ref)

    @pl.when(l > 0)
    def _():
        layer_body(x_pp.at[l % 2])

    # Single HBM writeback of the final activation on the very last grid
    # step (no per-layer / per-tile output stores).
    @pl.when(jnp.logical_and(l == num_layers - 1,
                             i == pl.num_programs(1) - 1))
    def _():
        cp = pltpu.make_async_copy(x_pp.at[num_layers % 2], o_ref, copy_sem)
        cp.start()
        cp.wait()


def gcn2_stack_pallas(adj_b16, x0_b16, conv_ws, betas, *, alpha, tm=128,
                      adj_resident=True,
                      vmem_limit_bytes=64 * 1024 * 1024):
    n, h = x0_b16.shape
    num_layers = conv_ws.shape[0]
    assert adj_b16.shape == (n, n)
    assert n % tm == 0 and h % 128 == 0

    ws_b = conv_ws.astype(jnp.bfloat16)
    betas = betas.astype(jnp.float32)

    if adj_resident:
        # Full A_hat kept in VMEM across all layers (constant block index).
        adj_spec = pl.BlockSpec((n, n), lambda l, i: (0, 0))
    else:
        # Streamed (tm, N) row tiles (use at large N on v7x's 64 MiB VMEM).
        adj_spec = pl.BlockSpec((tm, n), lambda l, i: (i, 0))

    kern = functools.partial(_gcn2_stack_kernel, alpha=float(alpha),
                             num_layers=num_layers, tm=tm,
                             adj_resident=adj_resident)
    out = pl.pallas_call(
        kern,
        out_shape=jax.ShapeDtypeStruct((n, h), jnp.bfloat16),
        grid=(num_layers, n // tm),
        in_specs=[
            pl.BlockSpec(memory_space=pltpu.MemorySpace.SMEM),        # betas (L,)
            adj_spec,                                                 # A_hat
            pl.BlockSpec((n, h), lambda l, i: (0, 0)),                # x0 resident
            pl.BlockSpec((pl.Squeezed(), h, h), lambda l, i: (l, 0, 0)),  # W_l
        ],
        # Raw HBM output; written once by an explicit DMA on the last step.
        out_specs=pl.BlockSpec(memory_space=pl.ANY),
        scratch_shapes=[
            pltpu.VMEM((2, n, h), jnp.bfloat16),   # ping-pong activation
            pltpu.SemaphoreType.DMA,               # final writeback semaphore
        ],
        compiler_params=pltpu.CompilerParams(
            # Both axes sequential: the layer recurrence lives in per-core
            # VMEM scratch, so the row axis must NOT be split across megacore
            # TCs and the layer axis must stay outermost.
            dimension_semantics=("arbitrary", "arbitrary"),
            vmem_limit_bytes=vmem_limit_bytes,
        ),
        cost_estimate=pl.CostEstimate(
            flops=2 * num_layers * (n * n * h + n * h * h),
            transcendentals=0,
            bytes_accessed=(n * n + num_layers * h * h + 3 * n * h) * 2,
        ),
    )(betas, adj_b16, x0_b16, ws_b)
    return out


# --------------------------------------------------------------------------
# Full forward pass (glue in plain JAX, hot path in Pallas)
# --------------------------------------------------------------------------
def net_forward(x, adj_b16_padded, params, *, alpha, theta, tm=128,
                adj_resident=True):
    n = x.shape[0]
    n_pad = adj_b16_padded.shape[0]
    # Zero-pad node rows so row tiles divide evenly.  Padded x0 rows equal
    # relu(bias) != 0 but never contaminate real rows because the padded
    # adjacency columns are zero.
    x_p = jnp.pad(x, ((0, n_pad - n), (0, 0)))

    # lin0 + relu, bf16 out (feeds the stack's MXU directly)
    x0 = linear_pallas(x_p, params["lin0_w"], params["lin0_b"],
                       relu=True, out_dtype=jnp.bfloat16, tm=tm)

    # fused GCN2Conv stack
    num_layers = params["conv_ws"].shape[0]
    betas = jnp.log(theta / jnp.arange(1, num_layers + 1, dtype=jnp.float32)
                    + 1.0)
    x_out = gcn2_stack_pallas(adj_b16_padded, x0, params["conv_ws"], betas,
                              alpha=alpha, tm=tm, adj_resident=adj_resident)

    # lin1 (no relu), f32 out; padded class dim sliced back inside.
    out = linear_pallas(x_out, params["lin1_w"], params["lin1_b"],
                        relu=False, out_dtype=jnp.float32, tm=tm)
    return out[:n]


def gcn_normalize(adj_dense):
    """GCNNorm: D^{-1/2} (A + I) D^{-1/2} on a dense adjacency."""
    n = adj_dense.shape[0]
    a_hat = adj_dense + jnp.eye(n, dtype=adj_dense.dtype)
    deg = jnp.sum(a_hat, axis=1)
    d_inv_sqrt = jnp.where(deg > 0, 1.0 / jnp.sqrt(deg), 0.0)
    return a_hat * d_inv_sqrt[:, None] * d_inv_sqrt[None, :]


def prepare_adj(adj_norm, tm=128):
    """Pad to a row-tile multiple and cast to bf16 ONCE (hoisted out of the
    per-forward path; the graph is fixed)."""
    n = adj_norm.shape[0]
    n_pad = _round_up(n, tm)
    adj_p = jnp.pad(adj_norm, ((0, n_pad - n), (0, n_pad - n)))
    return adj_p.astype(jnp.bfloat16)


# --------------------------------------------------------------------------
# Pure-JAX f32 reference (for a tolerance check of the bf16 pipeline)
# --------------------------------------------------------------------------
def net_forward_ref(x, adj_norm, params, *, alpha, theta):
    x = x @ params["lin0_w"] + params["lin0_b"]
    x = x0 = jnp.maximum(x, 0.0)
    num_layers = params["conv_ws"].shape[0]
    for l in range(num_layers):
        beta = math.log(theta / (l + 1) + 1.0)
        s = (1.0 - alpha) * (adj_norm @ x) + alpha * x0
        h = (1.0 - beta) * s + beta * (s @ params["conv_ws"][l])
        x = jnp.maximum(h + x, 0.0)
    return x @ params["lin1_w"] + params["lin1_b"]


# --------------------------------------------------------------------------
# Main
# --------------------------------------------------------------------------
if __name__ == "__main__":
    # Small synthetic sizes (real PPI: features=50, classes=121, hidden=2048,
    # layers=9, N~2k).  NOTE: tiling decisions (tm=256 on v6e, adj residency,
    # W buffering) only pay off at real PPI scale; these shapes just exercise
    # the kernels.
    NUM_NODES = 256
    NUM_FEATURES = 32
    HIDDEN = 128
    NUM_CLASSES = 16
    NUM_LAYERS = 3
    ALPHA = 0.5
    THETA = 1.0
    TM = 128            # raise to 256 on v6e/v7x for the 256-wide MXU
    # dropout = 0.0 -> identity (eval semantics)

    key = jax.random.PRNGKey(0)
    keys = jax.random.split(key, 7)

    # Node features
    x = jax.random.normal(keys[0], (NUM_NODES, NUM_FEATURES), dtype=jnp.float32)

    # Random symmetric adjacency (no self loops), then GCN normalization.
    rand = jax.random.uniform(keys[1], (NUM_NODES, NUM_NODES))
    upper = jnp.triu((rand < 0.05).astype(jnp.float32), k=1)
    adj = upper + upper.T
    adj_norm = gcn_normalize(adj)
    adj_b16 = prepare_adj(adj_norm, tm=TM)          # hoisted: pad + cast once

    # Parameter init (shapes from Net.__init__; weights pre-transposed to
    # (in, out); conv weights stacked to (L, H, H) for the fused kernel).
    def init_w(k, fan_in, fan_out):
        bound = 1.0 / math.sqrt(fan_in)
        return jax.random.uniform(
            k, (fan_in, fan_out), dtype=jnp.float32, minval=-bound, maxval=bound
        )

    conv_keys = jax.random.split(keys[6], NUM_LAYERS)
    params = {
        "lin0_w": init_w(keys[2], NUM_FEATURES, HIDDEN),
        "lin0_b": jax.random.uniform(
            keys[3], (1, HIDDEN), jnp.float32,
            -1.0 / math.sqrt(NUM_FEATURES), 1.0 / math.sqrt(NUM_FEATURES)),
        "lin1_w": init_w(keys[4], HIDDEN, NUM_CLASSES),
        "lin1_b": jax.random.uniform(
            keys[5], (1, NUM_CLASSES), jnp.float32,
            -1.0 / math.sqrt(HIDDEN), 1.0 / math.sqrt(HIDDEN)),
        "conv_ws": jnp.stack(
            [init_w(conv_keys[l], HIDDEN, HIDDEN) for l in range(NUM_LAYERS)]),
    }

    fwd = jax.jit(functools.partial(net_forward, alpha=ALPHA, theta=THETA,
                                    tm=TM, adj_resident=True))
    out = fwd(x, adj_b16, params)
    out = jax.block_until_ready(out)

    assert out.shape == (NUM_NODES, NUM_CLASSES), out.shape
    assert out.dtype == jnp.float32
    assert bool(jnp.all(jnp.isfinite(out)))

    # Tolerance check vs. pure-JAX f32 reference (bf16 MXU path is lossy).
    ref = net_forward_ref(x, adj_norm, params, alpha=ALPHA, theta=THETA)
    rel_err = float(jnp.linalg.norm(out - ref) /
                    (jnp.linalg.norm(ref) + 1e-8))
    assert rel_err < 1e-1, rel_err

    print("KERNEL_OK")
</pallas_src>

<mosaic_0001>
module attributes {stable_mosaic.version = 11 : i64} {
  func.func @_linear_kernel(%arg0: i32, %arg1: memref<128x128xbf16, #tpu.memory_space<vmem>>, %arg2: memref<128x128xbf16, #tpu.memory_space<vmem>>, %arg3: memref<1x128xf32, #tpu.memory_space<vmem>>, %arg4: memref<128x128xbf16, #tpu.memory_space<vmem>>) attributes {dimension_semantics = [#tpu.dimension_semantics<parallel>], iteration_bounds = array<i64: 2>, scalar_prefetch = 0 : i64, scratch_operands = 0 : i64, tpu.core_type = #tpu.core_type<tc>, window_params = [{transform_indices = @transform_0, window_bounds = array<i64: 128, 128>}, {pipeline_mode = #tpu.pipeline_mode<synchronous>, transform_indices = @transform_1, window_bounds = array<i64: 128, 128>}, {pipeline_mode = #tpu.pipeline_mode<synchronous>, transform_indices = @transform_2, window_bounds = array<i64: 1, 128>}, {transform_indices = @transform_3, window_bounds = array<i64: 128, 128>}]} {
    %c0 = arith.constant 0 : index
    %c0_0 = arith.constant 0 : index
    %0 = vector.load %arg1[%c0, %c0_0] : memref<128x128xbf16, #tpu.memory_space<vmem>>, vector<128x128xbf16>
    %c0_1 = arith.constant 0 : index
    %c0_2 = arith.constant 0 : index
    %1 = vector.load %arg2[%c0_1, %c0_2] : memref<128x128xbf16, #tpu.memory_space<vmem>>, vector<128x128xbf16>
    %cst = arith.constant dense<0.000000e+00> : vector<128x128xf32>
    %2 = tpu.matmul %0, %1, %cst {dimension_numbers = #tpu.dot_dimension_numbers<[1], [0], [0], [1], [0, 0, 1, 1], [], []>} : vector<128x128xbf16>, vector<128x128xbf16>, vector<128x128xf32> -> vector<128x128xf32>
    %c0_3 = arith.constant 0 : index
    %c0_4 = arith.constant 0 : index
    %3 = vector.load %arg3[%c0_3, %c0_4] : memref<1x128xf32, #tpu.memory_space<vmem>>, vector<1x128xf32>
    %4 = vector.broadcast %3 : vector<1x128xf32> to vector<128x128xf32>
    %5 = arith.addf %2, %4 : vector<128x128xf32>
    %cst_5 = arith.constant 0.000000e+00 : f32
    %6 = vector.broadcast %cst_5 : f32 to vector<128x128xf32>
    %7 = arith.maximumf %5, %6 : vector<128x128xf32>
    %8 = arith.truncf %7 : vector<128x128xf32> to vector<128x128xbf16>
    %c0_6 = arith.constant 0 : index
    %c0_7 = arith.constant 0 : index
    %9 = vector.load %arg4[%c0_6, %c0_7] : memref<128x128xbf16, #tpu.memory_space<vmem>>, vector<128x128xbf16>
    tpu.vector_store %arg4[%c0_6, %c0_7], %8 {strides = array<i32>} : memref<128x128xbf16, #tpu.memory_space<vmem>>, vector<128x128xbf16>,
    return
  }
  func.func @transform_0(%arg0: i32) -> (i32, i32) {
    %c0_i32 = arith.constant 0 : i32
    %c0_i32_0 = arith.constant 0 : i32
    return %arg0, %c0_i32 : i32, i32
  }
  func.func @transform_1(%arg0: i32) -> (i32, i32) {
    %c0_i32 = arith.constant 0 : i32
    %c0_i32_0 = arith.constant 0 : i32
    %c0_i32_1 = arith.constant 0 : i32
    return %c0_i32, %c0_i32_0 : i32, i32
  }
  func.func @transform_2(%arg0: i32) -> (i32, i32) {
    %c0_i32 = arith.constant 0 : i32
    %c0_i32_0 = arith.constant 0 : i32
    %c0_i32_1 = arith.constant 0 : i32
    return %c0_i32, %c0_i32_0 : i32, i32
  }
  func.func @transform_3(%arg0: i32) -> (i32, i32) {
    %c0_i32 = arith.constant 0 : i32
    %c0_i32_0 = arith.constant 0 : i32
    return %arg0, %c0_i32 : i32, i32
  }
}

module attributes {stable_mosaic.version = 11 : i64} {
  func.func @_gcn2_stack_kernel(%arg0: i32, %arg1: i32, %arg2: memref<3xf32, #tpu.memory_space<smem>>, %arg3: memref<256x256xbf16, #tpu.memory_space<vmem>>, %arg4: memref<256x128xbf16, #tpu.memory_space<vmem>>, %arg5: memref<1x128x128xbf16, #tpu.memory_space<vmem>>, %arg6: memref<256x128xbf16, #tpu.memory_space<any>>, %arg7: memref<2x256x128xbf16, #tpu.memory_space<vmem>>, %arg8: memref<!tpu.dma_semaphore, #tpu.memory_space<semaphore_mem>>) attributes {dimension_semantics = [#tpu.dimension_semantics<arbitrary>, #tpu.dimension_semantics<arbitrary>], iteration_bounds = array<i64: 3, 2>, scalar_prefetch = 0 : i64, scratch_operands = 2 : i64, tpu.core_type = #tpu.core_type<tc>, window_params = [{transform_indices = @transform_0, window_bounds = array<i64: 3>}, {pipeline_mode = #tpu.pipeline_mode<synchronous>, transform_indices = @transform_1, window_bounds = array<i64: 256, 256>}, {pipeline_mode = #tpu.pipeline_mode<synchronous>, transform_indices = @transform_2, window_bounds = array<i64: 256, 128>}, {transform_indices = @transform_3, window_bounds = array<i64: 1, 128, 128>}, {}]} {
    %c128_i32 = arith.constant 128 : i32
    %0 = arith.muli %arg1, %c128_i32 : i32
    %1 = tpu.assume_multiple %0, 128 : i32
    %2 = arith.index_cast %1 : i32 to index
    %c0 = arith.constant 0 : index
    %3 = vector.load %arg3[%2, %c0] : memref<256x256xbf16, #tpu.memory_space<vmem>>, vector<128x256xbf16>
    %4 = arith.index_cast %arg0 : i32 to index
    %5 = memref.load %arg2[%4] : memref<3xf32, #tpu.memory_space<smem>>
    %c0_0 = arith.constant 0 : index
    %c0_1 = arith.constant 0 : index
    %c0_2 = arith.constant 0 : index
    %6 = vector.load %arg5[%c0_0, %c0_1, %c0_2] : memref<1x128x128xbf16, #tpu.memory_space<vmem>>, vector<1x128x128xbf16>
    %7 = vector.shape_cast %6 : vector<1x128x128xbf16> to vector<128x128xbf16>
    %c1_i32 = arith.constant 1 : i32
    %8 = arith.addi %arg0, %c1_i32 : i32
    %c2_i32 = arith.constant 2 : i32
    %c0_i32 = arith.constant 0 : i32
    %9 = arith.cmpi eq, %c2_i32, %c0_i32 : i32
    %c1_i32_3 = arith.constant 1 : i32
    %10 = arith.select %9, %c1_i32_3, %c2_i32 : i32
    %11 = arith.remsi %8, %10 : i32
    %c0_i32_4 = arith.constant 0 : i32
    %12 = arith.cmpi ne, %11, %c0_i32_4 : i32
    %c0_i32_5 = arith.constant 0 : i32
    %13 = arith.cmpi slt, %11, %c0_i32_5 : i32
    %c0_i32_6 = arith.constant 0 : i32
    %14 = arith.cmpi slt, %10, %c0_i32_6 : i32
    %15 = arith.xori %13, %14 : i1
    %16 = arith.andi %15, %12 : i1
    %17 = arith.addi %11, %10 : i32
    %18 = arith.select %16, %17, %11 : i32
    %c0_i32_7 = arith.constant 0 : i32
    %19 = arith.cmpi eq, %arg0, %c0_i32_7 : i32
    %20 = arith.extui %19 : i1 to i32
    %c0_i32_8 = arith.constant 0 : i32
    %21 = arith.cmpi ne, %20, %c0_i32_8 : i32
    scf.if %21 {
      %c0_14 = arith.constant 0 : index
      %c0_15 = arith.constant 0 : index
      %30 = vector.load %arg4[%c0_14, %c0_15] : memref<256x128xbf16, #tpu.memory_space<vmem>>, vector<256x128xbf16>
      %cst = arith.constant dense<0.000000e+00> : vector<128x128xf32>
      %31 = tpu.matmul %3, %30, %cst {dimension_numbers = #tpu.dot_dimension_numbers<[1], [0], [0], [1], [0, 0, 1, 1], [], []>} : vector<128x256xbf16>, vector<256x128xbf16>, vector<128x128xf32> -> vector<128x128xf32>
      %cst_16 = arith.constant 5.000000e-01 : f32
      %32 = vector.broadcast %cst_16 : f32 to vector<128x128xf32>
      %33 = arith.mulf %32, %31 : vector<128x128xf32>
      %34 = arith.index_cast %1 : i32 to index
      %c0_17 = arith.constant 0 : index
      %35 = vector.load %arg4[%34, %c0_17] : memref<256x128xbf16, #tpu.memory_space<vmem>>, vector<128x128xbf16>
      %36 = arith.extf %35 : vector<128x128xbf16> to vector<128x128xf32>
      %cst_18 = arith.constant 5.000000e-01 : f32
      %37 = vector.broadcast %cst_18 : f32 to vector<128x128xf32>
      %38 = arith.mulf %37, %36 : vector<128x128xf32>
      %39 = arith.addf %33, %38 : vector<128x128xf32>
      %40 = arith.truncf %39 : vector<128x128xf32> to vector<128x128xbf16>
      %cst_19 = arith.constant dense<0.000000e+00> : vector<128x128xf32>
      %41 = tpu.matmul %40, %7, %cst_19 {dimension_numbers = #tpu.dot_dimension_numbers<[1], [0], [0], [1], [0, 0, 1, 1], [], []>} : vector<128x128xbf16>, vector<128x128xbf16>, vector<128x128xf32> -> vector<128x128xf32>
      %cst_20 = arith.constant 1.000000e+00 : f32
      %42 = arith.subf %cst_20, %5 : f32
      %43 = vector.broadcast %42 : f32 to vector<128x128xf32>
      %44 = arith.mulf %43, %39 : vector<128x128xf32>
      %45 = vector.broadcast %5 : f32 to vector<128x128xf32>
      %46 = arith.mulf %45, %41 : vector<128x128xf32>
      %47 = arith.addf %44, %46 : vector<128x128xf32>
      %48 = arith.index_cast %1 : i32 to index
      %c0_21 = arith.constant 0 : index
      %49 = vector.load %arg4[%48, %c0_21] : memref<256x128xbf16, #tpu.memory_space<vmem>>, vector<128x128xbf16>
      %50 = arith.extf %49 : vector<128x128xbf16> to vector<128x128xf32>
      %51 = arith.addf %47, %50 : vector<128x128xf32>
      %cst_22 = arith.constant 0.000000e+00 : f32
      %52 = vector.broadcast %cst_22 : f32 to vector<128x128xf32>
      %53 = arith.maximumf %51, %52 : vector<128x128xf32>
      %54 = arith.truncf %53 : vector<128x128xf32> to vector<128x128xbf16>
      %55 = arith.index_cast %18 : i32 to index
      %56 = arith.index_cast %1 : i32 to index
      %c0_23 = arith.constant 0 : index
      %57 = vector.load %arg7[%55, %56, %c0_23] : memref<2x256x128xbf16, #tpu.memory_space<vmem>>, vector<1x128x128xbf16>
      %58 = vector.shape_cast %57 : vector<1x128x128xbf16> to vector<128x128xbf16>
      %59 = vector.shape_cast %54 : vector<128x128xbf16> to vector<1x128x128xbf16>
      tpu.vector_store %arg7[%55, %56, %c0_23], %59 {strides = array<i32>} : memref<2x256x128xbf16, #tpu.memory_space<vmem>>, vector<1x128x128xbf16>,
    } else {
    }
    %c0_i32_9 = arith.constant 0 : i32
    %22 = arith.cmpi sgt, %arg0, %c0_i32_9 : i32
    %23 = arith.extui %22 : i1 to i32
    %c0_i32_10 = arith.constant 0 : i32
    %24 = arith.cmpi ne, %23, %c0_i32_10 : i32
    scf.if %24 {
      %c2_i32_14 = arith.constant 2 : i32
      %c0_i32_15 = arith.constant 0 : i32
      %30 = arith.cmpi eq, %c2_i32_14, %c0_i32_15 : i32
      %c1_i32_16 = arith.constant 1 : i32
      %31 = arith.select %30, %c1_i32_16, %c2_i32_14 : i32
      %32 = arith.remsi %arg0, %31 : i32
      %c0_i32_17 = arith.constant 0 : i32
      %33 = arith.cmpi ne, %32, %c0_i32_17 : i32
      %c0_i32_18 = arith.constant 0 : i32
      %34 = arith.cmpi slt, %32, %c0_i32_18 : i32
      %c0_i32_19 = arith.constant 0 : i32
      %35 = arith.cmpi slt, %31, %c0_i32_19 : i32
      %36 = arith.xori %34, %35 : i1
      %37 = arith.andi %36, %33 : i1
      %38 = arith.addi %32, %31 : i32
      %39 = arith.select %37, %38, %32 : i32
      %40 = arith.index_cast %39 : i32 to index
      %c0_20 = arith.constant 0 : index
      %c0_21 = arith.constant 0 : index
      %41 = vector.load %arg7[%40, %c0_20, %c0_21] : memref<2x256x128xbf16, #tpu.memory_space<vmem>>, vector<1x256x128xbf16>
      %42 = vector.shape_cast %41 : vector<1x256x128xbf16> to vector<256x128xbf16>
      %cst = arith.constant dense<0.000000e+00> : vector<128x128xf32>
      %43 = tpu.matmul %3, %42, %cst {dimension_numbers = #tpu.dot_dimension_numbers<[1], [0], [0], [1], [0, 0, 1, 1], [], []>} : vector<128x256xbf16>, vector<256x128xbf16>, vector<128x128xf32> -> vector<128x128xf32>
      %cst_22 = arith.constant 5.000000e-01 : f32
      %44 = vector.broadcast %cst_22 : f32 to vector<128x128xf32>
      %45 = arith.mulf %44, %43 : vector<128x128xf32>
      %46 = arith.index_cast %1 : i32 to index
      %c0_23 = arith.constant 0 : index
      %47 = vector.load %arg4[%46, %c0_23] : memref<256x128xbf16, #tpu.memory_space<vmem>>, vector<128x128xbf16>
      %48 = arith.extf %47 : vector<128x128xbf16> to vector<128x128xf32>
      %cst_24 = arith.constant 5.000000e-01 : f32
      %49 = vector.broadcast %cst_24 : f32 to vector<128x128xf32>
      %50 = arith.mulf %49, %48 : vector<128x128xf32>
      %51 = arith.addf %45, %50 : vector<128x128xf32>
      %52 = arith.truncf %51 : vector<128x128xf32> to vector<128x128xbf16>
      %cst_25 = arith.constant dense<0.000000e+00> : vector<128x128xf32>
      %53 = tpu.matmul %52, %7, %cst_25 {dimension_numbers = #tpu.dot_dimension_numbers<[1], [0], [0], [1], [0, 0, 1, 1], [], []>} : vector<128x128xbf16>, vector<128x128xbf16>, vector<128x128xf32> -> vector<128x128xf32>
      %cst_26 = arith.constant 1.000000e+00 : f32
      %54 = arith.subf %cst_26, %5 : f32
      %55 = vector.broadcast %54 : f32 to vector<128x128xf32>
      %56 = arith.mulf %55, %51 : vector<128x128xf32>
      %57 = vector.broadcast %5 : f32 to vector<128x128xf32>
      %58 = arith.mulf %57, %53 : vector<128x128xf32>
      %59 = arith.addf %56, %58 : vector<128x128xf32>
      %c0_i32_27 = arith.constant 0 : i32
      %c0_i32_28 = arith.constant 0 : i32
      %60 = tpu.memref_slice %arg7[%39, %c0_i32_27, %c0_i32_28] : memref<2x256x128xbf16, #tpu.memory_space<vmem>> -> memref<1x256x128xbf16, #tpu.memory_space<vmem>>
      %61 = tpu.memref_squeeze %60 : memref<1x256x128xbf16, #tpu.memory_space<vmem>> -> memref<256x128xbf16, #tpu.memory_space<vmem>>
      %62 = arith.index_cast %1 : i32 to index
      %c0_29 = arith.constant 0 : index
      %63 = vector.load %61[%62, %c0_29] : memref<256x128xbf16, #tpu.memory_space<vmem>>, vector<128x128xbf16>
      %64 = arith.extf %63 : vector<128x128xbf16> to vector<128x128xf32>
      %65 = arith.addf %59, %64 : vector<128x128xf32>
      %cst_30 = arith.constant 0.000000e+00 : f32
      %66 = vector.broadcast %cst_30 : f32 to vector<128x128xf32>
      %67 = arith.maximumf %65, %66 : vector<128x128xf32>
      %68 = arith.truncf %67 : vector<128x128xf32> to vector<128x128xbf16>
      %69 = arith.index_cast %18 : i32 to index
      %70 = arith.index_cast %1 : i32 to index
      %c0_31 = arith.constant 0 : index
      %71 = vector.load %arg7[%69, %70, %c0_31] : memref<2x256x128xbf16, #tpu.memory_space<vmem>>, vector<1x128x128xbf16>
      %72 = vector.shape_cast %71 : vector<1x128x128xbf16> to vector<128x128xbf16>
      %73 = vector.shape_cast %68 : vector<128x128xbf16> to vector<1x128x128xbf16>
      tpu.vector_store %arg7[%69, %70, %c0_31], %73 {strides = array<i32>} : memref<2x256x128xbf16, #tpu.memory_space<vmem>>, vector<1x128x128xbf16>,
    } else {
    }
    %c2_i32_11 = arith.constant 2 : i32
    %25 = arith.cmpi eq, %arg0, %c2_i32_11 : i32
    %c1_i32_12 = arith.constant 1 : i32
    %26 = arith.cmpi eq, %arg1, %c1_i32_12 : i32
    %27 = arith.andi %25, %26 : i1
    %28 = arith.extui %27 : i1 to i32
    %c0_i32_13 = arith.constant 0 : i32
    %29 = arith.cmpi ne, %28, %c0_i32_13 : i32
    scf.if %29 {
      %c1_i32_14 = arith.constant 1 : i32
      %c0_i32_15 = arith.constant 0 : i32
      %c0_i32_16 = arith.constant 0 : i32
      %30 = tpu.memref_slice %arg7[%c1_i32_14, %c0_i32_15, %c0_i32_16] : memref<2x256x128xbf16, #tpu.memory_space<vmem>> -> memref<1x256x128xbf16, #tpu.memory_space<vmem>>
      %31 = tpu.memref_squeeze %30 : memref<1x256x128xbf16, #tpu.memory_space<vmem>> -> memref<256x128xbf16, #tpu.memory_space<vmem>>
      tpu.enqueue_dma source(%31 : memref<256x128xbf16, #tpu.memory_space<vmem>>) target(%arg6 : memref<256x128xbf16, #tpu.memory_space<any>>) target_semaphore(%arg8 : memref<!tpu.dma_semaphore, #tpu.memory_space<semaphore_mem>>)
      %c1_i32_17 = arith.constant 1 : i32
      %c0_i32_18 = arith.constant 0 : i32
      %c0_i32_19 = arith.constant 0 : i32
      %32 = tpu.memref_slice %arg7[%c1_i32_17, %c0_i32_18, %c0_i32_19] : memref<2x256x128xbf16, #tpu.memory_space<vmem>> -> memref<1x256x128xbf16, #tpu.memory_space<vmem>>
      %33 = tpu.memref_squeeze %32 : memref<1x256x128xbf16, #tpu.memory_space<vmem>> -> memref<256x128xbf16, #tpu.memory_space<vmem>>
      tpu.wait_dma2 semaphore(%arg8 : memref<!tpu.dma_semaphore, #tpu.memory_space<semaphore_mem>>) src(%33 : memref<256x128xbf16, #tpu.memory_space<vmem>>) dst(%arg6 : memref<256x128xbf16, #tpu.memory_space<any>>)
    } else {
    }
    return
  }
  func.func @transform_0(%arg0: i32, %arg1: i32) -> i32 {
    %c0_i32 = arith.constant 0 : i32
    %c0_i32_0 = arith.constant 0 : i32
    return %c0_i32 : i32
  }
  func.func @transform_1(%arg0: i32, %arg1: i32) -> (i32, i32) {
    %c0_i32 = arith.constant 0 : i32
    %c0_i32_0 = arith.constant 0 : i32
    %c0_i32_1 = arith.constant 0 : i32
    return %c0_i32, %c0_i32_0 : i32, i32
  }
  func.func @transform_2(%arg0: i32, %arg1: i32) -> (i32, i32) {
    %c0_i32 = arith.constant 0 : i32
    %c0_i32_0 = arith.constant 0 : i32
    %c0_i32_1 = arith.constant 0 : i32
    return %c0_i32, %c0_i32_0 : i32, i32
  }
  func.func @transform_3(%arg0: i32, %arg1: i32) -> (i32, i32, i32) {
    %c0_i32 = arith.constant 0 : i32
    %c0_i32_0 = arith.constant 0 : i32
    %c0_i32_1 = arith.constant 0 : i32
    return %arg0, %c0_i32, %c0_i32_0 : i32, i32, i32
  }
}

module attributes {stable_mosaic.version = 11 : i64} {
  func.func @_linear_kernel(%arg0: i32, %arg1: memref<128x128xbf16, #tpu.memory_space<vmem>>, %arg2: memref<128x128xbf16, #tpu.memory_space<vmem>>, %arg3: memref<1x128xf32, #tpu.memory_space<vmem>>, %arg4: memref<128x128xf32, #tpu.memory_space<vmem>>) attributes {dimension_semantics = [#tpu.dimension_semantics<parallel>], iteration_bounds = array<i64: 2>, scalar_prefetch = 0 : i64, scratch_operands = 0 : i64, tpu.core_type = #tpu.core_type<tc>, window_params = [{transform_indices = @transform_0, window_bounds = array<i64: 128, 128>}, {pipeline_mode = #tpu.pipeline_mode<synchronous>, transform_indices = @transform_1, window_bounds = array<i64: 128, 128>}, {pipeline_mode = #tpu.pipeline_mode<synchronous>, transform_indices = @transform_2, window_bounds = array<i64: 1, 128>}, {transform_indices = @transform_3, window_bounds = array<i64: 128, 128>}]} {
    %c0 = arith.constant 0 : index
    %c0_0 = arith.constant 0 : index
    %0 = vector.load %arg1[%c0, %c0_0] : memref<128x128xbf16, #tpu.memory_space<vmem>>, vector<128x128xbf16>
    %c0_1 = arith.constant 0 : index
    %c0_2 = arith.constant 0 : index
    %1 = vector.load %arg2[%c0_1, %c0_2] : memref<128x128xbf16, #tpu.memory_space<vmem>>, vector<128x128xbf16>
    %cst = arith.constant dense<0.000000e+00> : vector<128x128xf32>
    %2 = tpu.matmul %0, %1, %cst {dimension_numbers = #tpu.dot_dimension_numbers<[1], [0], [0], [1], [0, 0, 1, 1], [], []>} : vector<128x128xbf16>, vector<128x128xbf16>, vector<128x128xf32> -> vector<128x128xf32>
    %c0_3 = arith.constant 0 : index
    %c0_4 = arith.constant 0 : index
    %3 = vector.load %arg3[%c0_3, %c0_4] : memref<1x128xf32, #tpu.memory_space<vmem>>, vector<1x128xf32>
    %4 = vector.broadcast %3 : vector<1x128xf32> to vector<128x128xf32>
    %5 = arith.addf %2, %4 : vector<128x128xf32>
    %c0_5 = arith.constant 0 : index
    %c0_6 = arith.constant 0 : index
    %6 = vector.load %arg4[%c0_5, %c0_6] : memref<128x128xf32, #tpu.memory_space<vmem>>, vector<128x128xf32>
    tpu.vector_store %arg4[%c0_5, %c0_6], %5 {strides = array<i32>} : memref<128x128xf32, #tpu.memory_space<vmem>>, vector<128x128xf32>,
    return
  }
  func.func @transform_0(%arg0: i32) -> (i32, i32) {
    %c0_i32 = arith.constant 0 : i32
    %c0_i32_0 = arith.constant 0 : i32
    return %arg0, %c0_i32 : i32, i32
  }
  func.func @transform_1(%arg0: i32) -> (i32, i32) {
    %c0_i32 = arith.constant 0 : i32
    %c0_i32_0 = arith.constant 0 : i32
    %c0_i32_1 = arith.constant 0 : i32
    return %c0_i32, %c0_i32_0 : i32, i32
  }
  func.func @transform_2(%arg0: i32) -> (i32, i32) {
    %c0_i32 = arith.constant 0 : i32
    %c0_i32_0 = arith.constant 0 : i32
    %c0_i32_1 = arith.constant 0 : i32
    return %c0_i32, %c0_i32_0 : i32, i32
  }
  func.func @transform_3(%arg0: i32) -> (i32, i32) {
    %c0_i32 = arith.constant 0 : i32
    %c0_i32_0 = arith.constant 0 : i32
    return %arg0, %c0_i32 : i32, i32
  }
}

</mosaic_0001>

<llo_original>
// kernel: net_forward.5
$region0: #{net_forward.5}
  #allocation0 [shape = 'u32[]', space=smem, size = 0x4, offset = 0x4, fixed_abs, tag = 'smem constant byte address 0x4 - core index']
  #allocation1 [shape = 'u32[144,128]{1,0:T(1,128)}', space=vmem, size = 0x12000, scoped, tag = 'internal scratch']
  %s0 = inlined_call_operand.vmem [shape: bf16[256,128], index: 0, kind: input, shape index: {}]
  %s1 = inlined_call_operand.vmem [shape: bf16[128,128], index: 1, kind: input, shape index: {}]
  %s2 = inlined_call_operand.vmem [shape: f32[1,128], index: 2, kind: input, shape index: {}]
  %s3 = inlined_call_operand.vmem [shape: f32[256,128], index: 3, kind: output, shape index: {}]
  %s4 = sld [smem:[#allocation0]]
  $region45: #{net_forward.5} parent=0
    _
  %s6 = ssub.s32 1, %s4
  %s7 = scalar_select 0, %s6, %s4
  loop: start=0, step=1, limit=4
  $region2: #{net_forward.5} parent=0 // loop_pre_header
    _
  $region3: #{net_forward.5} parent=0 // loop_header
    %s9 = sphi 0, %s13
    %p10 = scmp.ge.s32.totalorder %s9, 4
    %s19 = sphi 0, %s21
    %s22 = sphi 0, %s19
    %s23 = sphi 0, %s22
    %s39 = sphi 0, %s23
    %s43 = sphi 0, %s43
    %s45 = sphi 0, %s43
    %s46 = sphi 0, %s45
    %s60 = sphi 0, %s46
    %s64 = sphi 0, %s64
    %s66 = sphi 0, %s64
    %s67 = sphi 0, %s66
    %s81 = sphi 0, %s67
    %s87 = sphi 0, %s89
    %s90 = sphi 0, %s87
    %s91 = sphi 0, %s90
    %s107 = sphi 0, %s91
  $region4: #{net_forward.5} parent=0 // loop_header_branch
    %12 = sbr.rel (%p10) target = $region8
  $region5: #{net_forward.5} parent=0 // loop_body
    %s14 = ssub.s32 %s9, 1
    %s15 = ssub.s32 %s9, 2
    %s16 = sadd.s32 %s9, 1
    %s17 = ssub.s32 %s9, %s16
    %p18 = scmp.eq.s32.totalorder %s17, 0
    %s20 = sadd.s32 %s19, 1
    %s21 = scalar_select %p18, %s19, %s20
    %p24 = pneg %p18
    %p25 = scmp.eq.s32.totalorder %s9, 1
    %p26 = por %p24, %p25
    %p27 = scmp.ne.s32.totalorder %s19, %s22
    %p28 = scmp.eq.s32.totalorder %s9, 0
    %p29 = por %p27, %p28
    %p30 = scmp.ne.s32.totalorder %s19, %s22
    %p31 = scmp.eq.s32.totalorder %s14, 1
    %p32 = por %p30, %p31
    %p33 = scmp.ne.s32.totalorder %s22, %s23
    %p34 = scmp.eq.s32.totalorder %s14, 0
    %p35 = por %p33, %p34
    %p36 = scmp.ne.s32.totalorder %s22, %s23
    %p37 = scmp.eq.s32.totalorder %s15, 1
    %p38 = por %p36, %p37
    %p40 = scmp.ne.s32.totalorder %s23, %s39
    %p41 = scmp.eq.s32.totalorder %s15, 0
    %p42 = por %p40, %p41
    %s44 = sadd.s32 %s43, 1
    %p47 = scmp.eq.s32.totalorder %s9, 1
    %p48 = scmp.ne.s32.totalorder %s43, %s45
    %p49 = scmp.eq.s32.totalorder %s9, 0
    %p50 = por %p48, %p49
    %p51 = scmp.ne.s32.totalorder %s43, %s45
    %p52 = scmp.eq.s32.totalorder %s14, 1
    %p53 = por %p51, %p52
    %p54 = scmp.ne.s32.totalorder %s45, %s46
    %p55 = scmp.eq.s32.totalorder %s14, 0
    %p56 = por %p54, %p55
    %p57 = scmp.ne.s32.totalorder %s45, %s46
    %p58 = scmp.eq.s32.totalorder %s15, 1
    %p59 = por %p57, %p58
    %p61 = scmp.ne.s32.totalorder %s46, %s60
    %p62 = scmp.eq.s32.totalorder %s15, 0
    %p63 = por %p61, %p62
    %s65 = sadd.s32 %s64, 1
    %p68 = scmp.eq.s32.totalorder %s9, 1
    %p69 = scmp.ne.s32.totalorder %s64, %s66
    %p70 = scmp.eq.s32.totalorder %s9, 0
    %p71 = por %p69, %p70
    %p72 = scmp.ne.s32.totalorder %s64, %s66
    %p73 = scmp.eq.s32.totalorder %s14, 1
    %p74 = por %p72, %p73
    %p75 = scmp.ne.s32.totalorder %s66, %s67
    %p76 = scmp.eq.s32.totalorder %s14, 0
    %p77 = por %p75, %p76
    %p78 = scmp.ne.s32.totalorder %s66, %s67
    %p79 = scmp.eq.s32.totalorder %s15, 1
    %p80 = por %p78, %p79
    %p82 = scmp.ne.s32.totalorder %s67, %s81
    %p83 = scmp.eq.s32.totalorder %s15, 0
    %p84 = por %p82, %p83
    %s85 = ssub.s32 %s9, %s16
    %p86 = scmp.eq.s32.totalorder %s85, 0
    %s88 = sadd.s32 %s87, 1
    %s89 = scalar_select %p86, %s87, %s88
    %p92 = pneg %p86
    %p93 = scmp.eq.s32.totalorder %s9, 1
    %p94 = por %p92, %p93
    %p95 = scmp.ne.s32.totalorder %s87, %s90
    %p96 = scmp.eq.s32.totalorder %s9, 0
    %p97 = por %p95, %p96
    %p98 = scmp.ne.s32.totalorder %s87, %s90
    %p99 = scmp.eq.s32.totalorder %s14, 1
    %p100 = por %p98, %p99
    %p101 = scmp.ne.s32.totalorder %s90, %s91
    %p102 = scmp.eq.s32.totalorder %s14, 0
    %p103 = por %p101, %p102
    %p104 = scmp.ne.s32.totalorder %s90, %s91
    %p105 = scmp.eq.s32.totalorder %s15, 1
    %p106 = por %p104, %p105
    %p108 = scmp.ne.s32.totalorder %s91, %s107
    %p109 = scmp.eq.s32.totalorder %s15, 0
    %p110 = por %p108, %p109
    %p111 = scmp.le.s32.totalorder 1, %s9
    %p112 = scmp.lt.s32.totalorder %s9, 3
    %p113 = pnand %p111, %p112
    %p114 = pneg %p113
    // Predicated region
    $region9: #{net_forward.5} parent=5 // pred_check
      _
    $region10: #{net_forward.5} parent=5 // pred_check_branch
      %116 = sbr.rel (%p113) target = $region12
    $region11: #{net_forward.5} parent=5 // pred_region
      %s117 = ssub.s32 %s9, 1
      // Predicated region
      $region13: #{net_forward.5} parent=11 // pred_check
        %p118 = pneg %p56
      $region14: #{net_forward.5} parent=11 // pred_check_branch
        %120 = sbr.rel (%p118) target = $region16
      $region15: #{net_forward.5} parent=11 // pred_region
        _
      $region16: #{net_forward.5} parent=11 // pred_fallthru
        _
      // Predicated region
      $region17: #{net_forward.5} parent=11 // pred_check
        %p121 = pneg %p77
      $region18: #{net_forward.5} parent=11 // pred_check_branch
        %123 = sbr.rel (%p121) target = $region20
      $region19: #{net_forward.5} parent=11 // pred_region
        _
      $region20: #{net_forward.5} parent=11 // pred_fallthru
        _
    $region12: #{net_forward.5} parent=5 // pred_fallthru
      _
    %p124 = scmp.lt.s32.totalorder %s9, 2
    // Predicated region
    $region21: #{net_forward.5} parent=5 // pred_check
      %p125 = pneg %p124
    $region22: #{net_forward.5} parent=5 // pred_check_branch
      %127 = sbr.rel (%p125) target = $region24
    $region23: #{net_forward.5} parent=5 // pred_region
      // Predicated region
      $region25: #{net_forward.5} parent=23 // pred_check
        %p128 = pneg %p29
      $region26: #{net_forward.5} parent=23 // pred_check_branch
        %130 = sbr.rel (%p128) target = $region28
      $region27: #{net_forward.5} parent=23 // pred_region
        %s131 = smul.u32 16, %s9
        %p132 = scmp.lt.s32.totalorder %s131, 31
        %s133 = scalar_select %p132, %s131, 31
        %s134 = smul.addr %s133, 4
        %s135 = scalar_lea.vmem %s0, %s134
        %s136 = smul.u32 16, %s9
      $region28: #{net_forward.5} parent=23 // pred_fallthru
        _
    $region24: #{net_forward.5} parent=5 // pred_fallthru
      _
    %p137 = scmp.le.s32.totalorder 1, %s9
    %p138 = scmp.lt.s32.totalorder %s9, 3
    %p139 = pnand %p137, %p138
    %p140 = pneg %p139
    // Predicated region
    $region29: #{net_forward.5} parent=5 // pred_check
      _
    $region30: #{net_forward.5} parent=5 // pred_check_branch
      %142 = sbr.rel (%p139) target = $region32
    $region31: #{net_forward.5} parent=5 // pred_region
      %s143 = ssub.s32 %s9, 1
      %s144 = smul.u32 16, %s14
      %p145 = scmp.lt.s32.totalorder %s144, 31
      %s146 = scalar_select %p145, %s144, 31
      %s147 = smul.addr %s146, 4
      %s148 = scalar_lea.vmem %s0, %s147
      %p149 = pneg %p35
      %p150 = pneg %p32
      %p151 = pneg %p56
      %p152 = pneg %p53
      %p153 = pneg %p77
      %p154 = pneg %p74
      %p155 = pneg %p103
      %p156 = pneg %p100
      %s157 = smul.u32 16, %s14
      %p158 = scmp.lt.s32.totalorder %s157, 31
      %s159 = scalar_select %p158, %s157, 31
      %s160 = smul.addr %s159, 8
      %s161 = scalar_lea.vmem %s3, %s160
      %s162 = smul.u32 16, %s14
      %p163 = scmp.lt.s32.totalorder %s162, 31
      %s164 = scalar_select %p163, %s162, 31
      %s165 = smul.addr %s164, 4
      %s166 = scalar_lea.vmem %s0, %s165
      %s167 = smul.u32 16, %s14
      %s168 = smul.u32 16, %s14
      %p169 = scmp.lt.s32.totalorder %s168, 31
      %s170 = scalar_select %p169, %s168, 31
      %s171 = smul.addr %s170, 8
      %s172 = scalar_lea.vmem %s3, %s171
      %s173 = smul.u32 16, %s14
      %v175 = vld [vmem:[%s166] sm:$0xf]
      %v176 = vld [vmem:[%s166 + $0x4] sm:$0xf]
      %v177 = vld [vmem:[%s166 + $0x8] sm:$0xf]
      %v178 = vld [vmem:[%s166 + $0xc] sm:$0xf]
      %v179 = vld [vmem:[%s166 + $0x10] sm:$0xf]
      %v180 = vld [vmem:[%s166 + $0x14] sm:$0xf]
      %v181 = vld [vmem:[%s166 + $0x18] sm:$0xf]
      %v182 = vld [vmem:[%s166 + $0x1c] sm:$0xf]
      %v183 = vld [vmem:[%s166 + $0x20] sm:$0xf]
      %v184 = vld [vmem:[%s166 + $0x24] sm:$0xf]
      %v185 = vld [vmem:[%s166 + $0x28] sm:$0xf]
      %v186 = vld [vmem:[%s166 + $0x2c] sm:$0xf]
      %v187 = vld [vmem:[%s166 + $0x30] sm:$0xf]
      %v188 = vld [vmem:[%s166 + $0x34] sm:$0xf]
      %v189 = vld [vmem:[%s166 + $0x38] sm:$0xf]
      %v190 = vld [vmem:[%s166 + $0x3c] sm:$0xf]
      %v191 = vld [vmem:[%s1] sm:$0xf]
      %v192 = vld [vmem:[%s1 + $0x4] sm:$0xf]
      %v193 = vld [vmem:[%s1 + $0x8] sm:$0xf]
      %v194 = vld [vmem:[%s1 + $0xc] sm:$0xf]
      %v195 = vld [vmem:[%s1 + $0x10] sm:$0xf]
      %v196 = vld [vmem:[%s1 + $0x14] sm:$0xf]
      %v197 = vld [vmem:[%s1 + $0x18] sm:$0xf]
      %v198 = vld [vmem:[%s1 + $0x1c] sm:$0xf]
      %v199 = vld [vmem:[%s1 + $0x20] sm:$0xf]
      %v200 = vld [vmem:[%s1 + $0x24] sm:$0xf]
      %v201 = vld [vmem:[%s1 + $0x28] sm:$0xf]
      %v202 = vld [vmem:[%s1 + $0x2c] sm:$0xf]
      %v203 = vld [vmem:[%s1 + $0x30] sm:$0xf]
      %v204 = vld [vmem:[%s1 + $0x34] sm:$0xf]
      %v205 = vld [vmem:[%s1 + $0x38] sm:$0xf]
      %v206 = vld [vmem:[%s1 + $0x3c] sm:$0xf]
      %v207 = vld [vmem:[%s2] sm:$0x1]
      %v209 = vlaneseq
      %v210 = vshrl.u32 %v209, 7
      %v211 = vsub.s32 0, %v210
      %v212 = vrot.slane %v207, %v211
      %v230 = vunpack.c.l.b16 %v175
      %v231 = vunpack.c.l.b16 %v176
      %v232 = vunpack.c.l.b16 %v177
      %v233 = vunpack.c.l.b16 %v178
      %v234 = vunpack.c.l.b16 %v179
      %v235 = vunpack.c.l.b16 %v180
      %v236 = vunpack.c.l.b16 %v181
      %v237 = vunpack.c.l.b16 %v182
      %v238 = vunpack.c.l.b16 %v183
      %v239 = vunpack.c.l.b16 %v184
      %v240 = vunpack.c.l.b16 %v185
      %v241 = vunpack.c.l.b16 %v186
      %v242 = vunpack.c.l.b16 %v187
      %v243 = vunpack.c.l.b16 %v188
      %v244 = vunpack.c.l.b16 %v189
      %v245 = vunpack.c.l.b16 %v190
      %v246 = vpack.c.b16 %v231, %v230
      %v247 = vpack.c.b16 %v233, %v232
      %v248 = vpack.c.b16 %v235, %v234
      %v249 = vpack.c.b16 %v237, %v236
      %v250 = vpack.c.b16 %v239, %v238
      %v251 = vpack.c.b16 %v241, %v240
      %v252 = vpack.c.b16 %v243, %v242
      %v253 = vpack.c.b16 %v245, %v244
      %v278 = vunpack.c.l.b16 %v191
      %v279 = vunpack.c.l.b16 %v192
      %v280 = vunpack.c.l.b16 %v193
      %v281 = vunpack.c.l.b16 %v194
      %v282 = vunpack.c.l.b16 %v195
      %v283 = vunpack.c.l.b16 %v196
      %v284 = vunpack.c.l.b16 %v197
      %v285 = vunpack.c.l.b16 %v198
      %v286 = vunpack.c.l.b16 %v199
      %v287 = vunpack.c.l.b16 %v200
      %v288 = vunpack.c.l.b16 %v201
      %v289 = vunpack.c.l.b16 %v202
      %v290 = vunpack.c.l.b16 %v203
      %v291 = vunpack.c.l.b16 %v204
      %v292 = vunpack.c.l.b16 %v205
      %v293 = vunpack.c.l.b16 %v206
      %v294 = vpack.c.b16 %v279, %v278
      %v295 = vpack.c.b16 %v281, %v280
      %v296 = vpack.c.b16 %v283, %v282
      %v297 = vpack.c.b16 %v285, %v284
      %v298 = vpack.c.b16 %v287, %v286
      %v299 = vpack.c.b16 %v289, %v288
      %v300 = vpack.c.b16 %v291, %v290
      %v301 = vpack.c.b16 %v293, %v292
      %310 = vmatprep.subr.bf16.mxu0 0
      %311 = vmatpush1.bf16.msra.mxu0 %v294
      %312 = vmatprep.subr.bf16.mxu0 0
      %313 = vmatpush1.bf16.msra.mxu0 %v295
      %314 = vmatprep.subr.bf16.mxu0 0
      %315 = vmatpush1.bf16.msra.mxu0 %v296
      %316 = vmatprep.subr.bf16.mxu0 0
      %317 = vmatpush1.bf16.msra.mxu0 %v297
      %318 = vmatprep.subr.bf16.mxu0 0
      %319 = vmatpush1.bf16.msra.mxu0 %v298
      %320 = vmatprep.subr.bf16.mxu0 0
      %321 = vmatpush1.bf16.msra.mxu0 %v299
      %322 = vmatprep.subr.bf16.mxu0 0
      %323 = vmatpush1.bf16.msra.mxu0 %v300
      %324 = vmatprep.subr.bf16.mxu0 0
      %325 = vmatpush1.bf16.msra.mxu0 %v301
      %326 = vmatprep.subr.bf16.mxu0 0
      %327 = vmatpush1.bf16.msra.mxu0 0
      %328 = vmatprep.subr.bf16.mxu0 0
      %329 = vmatpush1.bf16.msra.mxu0 0
      %330 = vmatprep.subr.bf16.mxu0 0
      %331 = vmatpush1.bf16.msra.mxu0 0
      %332 = vmatprep.subr.bf16.mxu0 0
      %333 = vmatpush1.bf16.msra.mxu0 0
      %334 = vmatprep.subr.bf16.mxu0 0
      %335 = vmatpush1.bf16.msra.mxu0 0
      %336 = vmatprep.subr.bf16.mxu0 0
      %337 = vmatpush1.bf16.msra.mxu0 0
      %338 = vmatprep.subr.bf16.mxu0 0
      %339 = vmatpush1.bf16.msra.mxu0 0
      %340 = vmatprep.subr.bf16.mxu0 0
      %341 = vmatpush1.bf16.msra.mxu0 0
      %342 = vmatprep.mubr.bf16.mxu0 0
      %343 = vmatmul.mubr.bf16.gmra.mrb[0].mxu0 %v246
      %v344 = vpop.f32.mrb[0].mxu0
      %v345 = vadd.f32 %v212, %v344
      %v346 = vpop.f32.mrb[0].mxu0
      %v347 = vpop.f32.mrb[0].mxu0
      %v348 = vadd.f32 %v212, %v347
      %v349 = vpop.f32.mrb[0].mxu0
      %350 = vmatprep.mubr.bf16.mxu0 0
      %351 = vmatmul.mubr.bf16.gmra.mrb[0].mxu0 %v247
      %v352 = vpop.f32.mrb[0].mxu0
      %v353 = vadd.f32 %v212, %v352
      %v354 = vpop.f32.mrb[0].mxu0
      %v355 = vpop.f32.mrb[0].mxu0
      %v356 = vadd.f32 %v212, %v355
      %v357 = vpop.f32.mrb[0].mxu0
      %358 = vmatprep.mubr.bf16.mxu0 0
      %359 = vmatmul.mubr.bf16.gmra.mrb[0].mxu0 %v248
      %v360 = vpop.f32.mrb[0].mxu0
      %v361 = vadd.f32 %v212, %v360
      %v362 = vpop.f32.mrb[0].mxu0
      %v363 = vpop.f32.mrb[0].mxu0
      %v364 = vadd.f32 %v212, %v363
      %v365 = vpop.f32.mrb[0].mxu0
      %366 = vmatprep.mubr.bf16.mxu0 0
      %367 = vmatmul.mubr.bf16.gmra.mrb[0].mxu0 %v249
      %v368 = vpop.f32.mrb[0].mxu0
      %v369 = vadd.f32 %v212, %v368
      %v370 = vpop.f32.mrb[0].mxu0
      %v371 = vpop.f32.mrb[0].mxu0
      %v372 = vadd.f32 %v212, %v371
      %v373 = vpop.f32.mrb[0].mxu0
      %374 = vmatprep.mubr.bf16.mxu0 0
      %375 = vmatmul.mubr.bf16.gmra.mrb[0].mxu0 %v250
      %v376 = vpop.f32.mrb[0].mxu0
      %v377 = vadd.f32 %v212, %v376
      %v378 = vpop.f32.mrb[0].mxu0
      %v379 = vpop.f32.mrb[0].mxu0
      %v380 = vadd.f32 %v212, %v379
      %v381 = vpop.f32.mrb[0].mxu0
      %382 = vmatprep.mubr.bf16.mxu0 0
      %383 = vmatmul.mubr.bf16.gmra.mrb[0].mxu0 %v251
      %v384 = vpop.f32.mrb[0].mxu0
      %v385 = vadd.f32 %v212, %v384
      %v386 = vpop.f32.mrb[0].mxu0
      %v387 = vpop.f32.mrb[0].mxu0
      %v388 = vadd.f32 %v212, %v387
      %v389 = vpop.f32.mrb[0].mxu0
      %390 = vmatprep.mubr.bf16.mxu0 0
      %391 = vmatmul.mubr.bf16.gmra.mrb[0].mxu0 %v252
      %v392 = vpop.f32.mrb[0].mxu0
      %v393 = vadd.f32 %v212, %v392
      %v394 = vpop.f32.mrb[0].mxu0
      %v395 = vpop.f32.mrb[0].mxu0
      %v396 = vadd.f32 %v212, %v395
      %v397 = vpop.f32.mrb[0].mxu0
      %398 = vmatprep.mubr.bf16.mxu0 0
      %399 = vmatmul.mubr.bf16.gmra.mrb[0].mxu0 %v253
      %v400 = vpop.f32.mrb[0].mxu0
      %v401 = vadd.f32 %v212, %v400
      %v402 = vpop.f32.mrb[0].mxu0
      %v403 = vpop.f32.mrb[0].mxu0
      %v404 = vadd.f32 %v212, %v403
      %v405 = vpop.f32.mrb[0].mxu0
      %406 = vdwg.mxu0
      %407 = vst [vmem:[%s172] sm:$0xff] %v345
      %408 = vst [vmem:[%s172 + $0x8] sm:$0xff] %v348
      %409 = vst [vmem:[%s172 + $0x10] sm:$0xff] %v353
      %410 = vst [vmem:[%s172 + $0x18] sm:$0xff] %v356
      %411 = vst [vmem:[%s172 + $0x20] sm:$0xff] %v361
      %412 = vst [vmem:[%s172 + $0x28] sm:$0xff] %v364
      %413 = vst [vmem:[%s172 + $0x30] sm:$0xff] %v369
      %414 = vst [vmem:[%s172 + $0x38] sm:$0xff] %v372
      %415 = vst [vmem:[%s172 + $0x40] sm:$0xff] %v377
      %416 = vst [vmem:[%s172 + $0x48] sm:$0xff] %v380
      %417 = vst [vmem:[%s172 + $0x50] sm:$0xff] %v385
      %418 = vst [vmem:[%s172 + $0x58] sm:$0xff] %v388
      %419 = vst [vmem:[%s172 + $0x60] sm:$0xff] %v393
      %420 = vst [vmem:[%s172 + $0x68] sm:$0xff] %v396
      %421 = vst [vmem:[%s172 + $0x70] sm:$0xff] %v401
      %422 = vst [vmem:[%s172 + $0x78] sm:$0xff] %v404
      %s423 = smul.u32 16, %s14
      %p424 = scmp.lt.s32.totalorder %s423, 31
      %s425 = scalar_select %p424, %s423, 31
      %s426 = smul.addr %s425, 8
      %s427 = scalar_lea.vmem %s3, %s426
      // Predicated region
      $region33: #{net_forward.5} parent=31 // pred_check
        %p428 = pneg %p100
      $region34: #{net_forward.5} parent=31 // pred_check_branch
        %430 = sbr.rel (%p428) target = $region36
      $region35: #{net_forward.5} parent=31 // pred_region
        %s431 = smul.u32 16, %s14
      $region36: #{net_forward.5} parent=31 // pred_fallthru
        _
    $region32: #{net_forward.5} parent=5 // pred_fallthru
      _
    %p432 = scmp.le.s32.totalorder 2, %s9
    // Predicated region
    $region37: #{net_forward.5} parent=5 // pred_check
      %p433 = pneg %p432
    $region38: #{net_forward.5} parent=5 // pred_check_branch
      %435 = sbr.rel (%p433) target = $region40
    $region39: #{net_forward.5} parent=5 // pred_region
      %s436 = ssub.s32 %s9, 2
      // Predicated region
      $region41: #{net_forward.5} parent=39 // pred_check
        %p437 = pneg %p106
      $region42: #{net_forward.5} parent=39 // pred_check_branch
        %439 = sbr.rel (%p437) target = $region44
      $region43: #{net_forward.5} parent=39 // pred_region
        %s440 = smul.u32 16, %s15
        %p441 = scmp.lt.s32.totalorder %s440, 31
        %s442 = scalar_select %p441, %s440, 31
        %s443 = smul.addr %s442, 8
        %s444 = scalar_lea.vmem %s3, %s443
      $region44: #{net_forward.5} parent=39 // pred_fallthru
        _
    $region40: #{net_forward.5} parent=5 // pred_fallthru
      _
  $region6: #{net_forward.5} parent=0 // loop_footer
    %s13 = sadd.s32 1, %s9
  $region7: #{net_forward.5} parent=0 // loop_footer_branch
    %8 = sbr.rel target = $region3
  $region8: #{net_forward.5} parent=0 // loop_exit
    _

// kernel: net_forward.3
$region0: #{net_forward.3}
  #allocation0 [shape = 'u32[]', space=smem, size = 0x4, offset = 0x4, fixed_abs, tag = 'smem constant byte address 0x4 - core index']
  #allocation1 [shape = 'u32[144,128]{1,0:T(1,128)}', space=vmem, size = 0x12000, scoped, tag = 'internal scratch']
  %s0 = inlined_call_operand.vmem [shape: bf16[256,128], index: 0, kind: input, shape index: {}]
  %s1 = inlined_call_operand.vmem [shape: bf16[128,128], index: 1, kind: input, shape index: {}]
  %s2 = inlined_call_operand.vmem [shape: f32[1,128], index: 2, kind: input, shape index: {}]
  %s3 = inlined_call_operand.hbm [shape: bf16[256,128], index: 3, kind: output, shape index: {}]
  %s4 = sld [smem:[#allocation0]]
  $region45: #{net_forward.3} parent=0
    _
  %s6 = ssub.s32 1, %s4
  %s7 = scalar_select 0, %s6, %s4
  $region1: #{net_forward.3} parent=0
    #allocation2 [shape = 'u8[65536]{0}', space=vmem, size = 0x10000, scoped, tag = 'output window, operand 0']
    #allocation3 [shape = 's32[2]{0}', space=sflag, size = 0x8, scoped, tag = 'scoped memory for net_forward.3']
    %8 = vsyncpa [#allocation3], 0
    %s9 = scalar_lea.sflag [#allocation3], 1
    %10 = vsyncpa %s9, 0
    loop: start=0, step=1, limit=4
    $region2: #{net_forward.3} parent=1 // loop_pre_header
      _
    $region3: #{net_forward.3} parent=1 // loop_header
      %s12 = sphi 0, %s16
      %p13 = scmp.ge.s32.totalorder %s12, 4
      %s22 = sphi 0, %s24
      %s25 = sphi 0, %s22
      %s26 = sphi 0, %s25
      %s42 = sphi 0, %s26
      %s46 = sphi 0, %s46
      %s48 = sphi 0, %s46
      %s49 = sphi 0, %s48
      %s63 = sphi 0, %s49
      %s67 = sphi 0, %s67
      %s69 = sphi 0, %s67
      %s70 = sphi 0, %s69
      %s84 = sphi 0, %s70
      %s90 = sphi 0, %s92
      %s93 = sphi 0, %s90
      %s94 = sphi 0, %s93
      %s110 = sphi 0, %s94
    $region4: #{net_forward.3} parent=1 // loop_header_branch
      %15 = sbr.rel (%p13) target = $region8
    $region5: #{net_forward.3} parent=1 // loop_body
      %s17 = ssub.s32 %s12, 1
      %s18 = ssub.s32 %s12, 2
      %s19 = sadd.s32 %s12, 1
      %s20 = ssub.s32 %s12, %s19
      %p21 = scmp.eq.s32.totalorder %s20, 0
      %s23 = sadd.s32 %s22, 1
      %s24 = scalar_select %p21, %s22, %s23
      %p27 = pneg %p21
      %p28 = scmp.eq.s32.totalorder %s12, 1
      %p29 = por %p27, %p28
      %p30 = scmp.ne.s32.totalorder %s22, %s25
      %p31 = scmp.eq.s32.totalorder %s12, 0
      %p32 = por %p30, %p31
      %p33 = scmp.ne.s32.totalorder %s22, %s25
      %p34 = scmp.eq.s32.totalorder %s17, 1
      %p35 = por %p33, %p34
      %p36 = scmp.ne.s32.totalorder %s25, %s26
      %p37 = scmp.eq.s32.totalorder %s17, 0
      %p38 = por %p36, %p37
      %p39 = scmp.ne.s32.totalorder %s25, %s26
      %p40 = scmp.eq.s32.totalorder %s18, 1
      %p41 = por %p39, %p40
      %p43 = scmp.ne.s32.totalorder %s26, %s42
      %p44 = scmp.eq.s32.totalorder %s18, 0
      %p45 = por %p43, %p44
      %s47 = sadd.s32 %s46, 1
      %p50 = scmp.eq.s32.totalorder %s12, 1
      %p51 = scmp.ne.s32.totalorder %s46, %s48
      %p52 = scmp.eq.s32.totalorder %s12, 0
      %p53 = por %p51, %p52
      %p54 = scmp.ne.s32.totalorder %s46, %s48
      %p55 = scmp.eq.s32.totalorder %s17, 1
      %p56 = por %p54, %p55
      %p57 = scmp.ne.s32.totalorder %s48, %s49
      %p58 = scmp.eq.s32.totalorder %s17, 0
      %p59 = por %p57, %p58
      %p60 = scmp.ne.s32.totalorder %s48, %s49
      %p61 = scmp.eq.s32.totalorder %s18, 1
      %p62 = por %p60, %p61
      %p64 = scmp.ne.s32.totalorder %s49, %s63
      %p65 = scmp.eq.s32.totalorder %s18, 0
      %p66 = por %p64, %p65
      %s68 = sadd.s32 %s67, 1
      %p71 = scmp.eq.s32.totalorder %s12, 1
      %p72 = scmp.ne.s32.totalorder %s67, %s69
      %p73 = scmp.eq.s32.totalorder %s12, 0
      %p74 = por %p72, %p73
      %p75 = scmp.ne.s32.totalorder %s67, %s69
      %p76 = scmp.eq.s32.totalorder %s17, 1
      %p77 = por %p75, %p76
      %p78 = scmp.ne.s32.totalorder %s69, %s70
      %p79 = scmp.eq.s32.totalorder %s17, 0
      %p80 = por %p78, %p79
      %p81 = scmp.ne.s32.totalorder %s69, %s70
      %p82 = scmp.eq.s32.totalorder %s18, 1
      %p83 = por %p81, %p82
      %p85 = scmp.ne.s32.totalorder %s70, %s84
      %p86 = scmp.eq.s32.totalorder %s18, 0
      %p87 = por %p85, %p86
      %s88 = ssub.s32 %s12, %s19
      %p89 = scmp.eq.s32.totalorder %s88, 0
      %s91 = sadd.s32 %s90, 1
      %s92 = scalar_select %p89, %s90, %s91
      %p95 = pneg %p89
      %p96 = scmp.eq.s32.totalorder %s12, 1
      %p97 = por %p95, %p96
      %p98 = scmp.ne.s32.totalorder %s90, %s93
      %p99 = scmp.eq.s32.totalorder %s12, 0
      %p100 = por %p98, %p99
      %p101 = scmp.ne.s32.totalorder %s90, %s93
      %p102 = scmp.eq.s32.totalorder %s17, 1
      %p103 = por %p101, %p102
      %p104 = scmp.ne.s32.totalorder %s93, %s94
      %p105 = scmp.eq.s32.totalorder %s17, 0
      %p106 = por %p104, %p105
      %p107 = scmp.ne.s32.totalorder %s93, %s94
      %p108 = scmp.eq.s32.totalorder %s18, 1
      %p109 = por %p107, %p108
      %p111 = scmp.ne.s32.totalorder %s94, %s110
      %p112 = scmp.eq.s32.totalorder %s18, 0
      %p113 = por %p111, %p112
      %p114 = scmp.le.s32.totalorder 1, %s12
      %p115 = scmp.lt.s32.totalorder %s12, 3
      %p116 = pnand %p114, %p115
      %p117 = pneg %p116
      // Predicated region
      $region9: #{net_forward.3} parent=5 // pred_check
        _
      $region10: #{net_forward.3} parent=5 // pred_check_branch
        %119 = sbr.rel (%p116) target = $region12
      $region11: #{net_forward.3} parent=5 // pred_region
        %s120 = ssub.s32 %s12, 1
        // Predicated region
        $region13: #{net_forward.3} parent=11 // pred_check
          %p121 = pneg %p59
        $region14: #{net_forward.3} parent=11 // pred_check_branch
          %123 = sbr.rel (%p121) target = $region16
        $region15: #{net_forward.3} parent=11 // pred_region
          _
        $region16: #{net_forward.3} parent=11 // pred_fallthru
          _
        // Predicated region
        $region17: #{net_forward.3} parent=11 // pred_check
          %p124 = pneg %p80
        $region18: #{net_forward.3} parent=11 // pred_check_branch
          %126 = sbr.rel (%p124) target = $region20
        $region19: #{net_forward.3} parent=11 // pred_region
          _
        $region20: #{net_forward.3} parent=11 // pred_fallthru
          _
      $region12: #{net_forward.3} parent=5 // pred_fallthru
        _
      %p127 = scmp.lt.s32.totalorder %s12, 2
      // Predicated region
      $region21: #{net_forward.3} parent=5 // pred_check
        %p128 = pneg %p127
      $region22: #{net_forward.3} parent=5 // pred_check_branch
        %130 = sbr.rel (%p128) target = $region24
      $region23: #{net_forward.3} parent=5 // pred_region
        // Predicated region
        $region25: #{net_forward.3} parent=23 // pred_check
          %p131 = pneg %p32
        $region26: #{net_forward.3} parent=23 // pred_check_branch
          %133 = sbr.rel (%p131) target = $region28
        $region27: #{net_forward.3} parent=23 // pred_region
          %s134 = smul.u32 16, %s12
          %p135 = scmp.lt.s32.totalorder %s134, 31
          %s136 = scalar_select %p135, %s134, 31
          %s137 = smul.addr %s136, 4
          %s138 = scalar_lea.vmem %s0, %s137
          %s139 = smul.u32 16, %s12
        $region28: #{net_forward.3} parent=23 // pred_fallthru
          _
      $region24: #{net_forward.3} parent=5 // pred_fallthru
        _
      %p140 = scmp.le.s32.totalorder 1, %s12
      %p141 = scmp.lt.s32.totalorder %s12, 3
      %p142 = pnand %p140, %p141
      %p143 = pneg %p142
      // Predicated region
      $region29: #{net_forward.3} parent=5 // pred_check
        _
      $region30: #{net_forward.3} parent=5 // pred_check_branch
        %145 = sbr.rel (%p142) target = $region32
      $region31: #{net_forward.3} parent=5 // pred_region
        %s146 = ssub.s32 %s12, 1
        %s147 = smul.u32 16, %s17
        %p148 = scmp.lt.s32.totalorder %s147, 31
        %s149 = scalar_select %p148, %s147, 31
        %s150 = smul.addr %s149, 4
        %s151 = scalar_lea.vmem %s0, %s150
        %p152 = pneg %p38
        %p153 = pneg %p35
        %p154 = pneg %p59
        %p155 = pneg %p56
        %p156 = pneg %p80
        %p157 = pneg %p77
        %p158 = pneg %p106
        %p159 = pneg %p103
        %s160 = sand.u32 %s93, 1
        %s161 = scalar_lea.sflag [#allocation3], %s160
        %s162 = sand.u32 %s93, 1
        %s163 = smul.addr %s162, 64
        %s164 = scalar_lea.vmem [#allocation2], %s163
        %s165 = smul.u32 16, %s17
        %p166 = scmp.lt.s32.totalorder %s165, 31
        %s167 = scalar_select %p166, %s165, 31
        %s168 = smul.addr %s167, 4
        %s169 = scalar_lea.vmem %s0, %s168
        %s170 = smul.u32 16, %s17
        %s171 = smul.u32 16, %s17
        %v173 = vld [vmem:[%s169] sm:$0xf]
        %v174 = vld [vmem:[%s169 + $0x4] sm:$0xf]
        %v175 = vld [vmem:[%s169 + $0x8] sm:$0xf]
        %v176 = vld [vmem:[%s169 + $0xc] sm:$0xf]
        %v177 = vld [vmem:[%s169 + $0x10] sm:$0xf]
        %v178 = vld [vmem:[%s169 + $0x14] sm:$0xf]
        %v179 = vld [vmem:[%s169 + $0x18] sm:$0xf]
        %v180 = vld [vmem:[%s169 + $0x1c] sm:$0xf]
        %v181 = vld [vmem:[%s169 + $0x20] sm:$0xf]
        %v182 = vld [vmem:[%s169 + $0x24] sm:$0xf]
        %v183 = vld [vmem:[%s169 + $0x28] sm:$0xf]
        %v184 = vld [vmem:[%s169 + $0x2c] sm:$0xf]
        %v185 = vld [vmem:[%s169 + $0x30] sm:$0xf]
        %v186 = vld [vmem:[%s169 + $0x34] sm:$0xf]
        %v187 = vld [vmem:[%s169 + $0x38] sm:$0xf]
        %v188 = vld [vmem:[%s169 + $0x3c] sm:$0xf]
        %v189 = vld [vmem:[%s1] sm:$0xf]
        %v190 = vld [vmem:[%s1 + $0x4] sm:$0xf]
        %v191 = vld [vmem:[%s1 + $0x8] sm:$0xf]
        %v192 = vld [vmem:[%s1 + $0xc] sm:$0xf]
        %v193 = vld [vmem:[%s1 + $0x10] sm:$0xf]
        %v194 = vld [vmem:[%s1 + $0x14] sm:$0xf]
        %v195 = vld [vmem:[%s1 + $0x18] sm:$0xf]
        %v196 = vld [vmem:[%s1 + $0x1c] sm:$0xf]
        %v197 = vld [vmem:[%s1 + $0x20] sm:$0xf]
        %v198 = vld [vmem:[%s1 + $0x24] sm:$0xf]
        %v199 = vld [vmem:[%s1 + $0x28] sm:$0xf]
        %v200 = vld [vmem:[%s1 + $0x2c] sm:$0xf]
        %v201 = vld [vmem:[%s1 + $0x30] sm:$0xf]
        %v202 = vld [vmem:[%s1 + $0x34] sm:$0xf]
        %v203 = vld [vmem:[%s1 + $0x38] sm:$0xf]
        %v204 = vld [vmem:[%s1 + $0x3c] sm:$0xf]
        %v205 = vld [vmem:[%s2] sm:$0x1]
        %v207 = vlaneseq
        %v208 = vshrl.u32 %v207, 7
        %v209 = vsub.s32 0, %v208
        %v210 = vrot.slane %v205, %v209
        %v228 = vunpack.c.l.b16 %v173
        %v229 = vunpack.c.l.b16 %v174
        %v230 = vunpack.c.l.b16 %v175
        %v231 = vunpack.c.l.b16 %v176
        %v232 = vunpack.c.l.b16 %v177
        %v233 = vunpack.c.l.b16 %v178
        %v234 = vunpack.c.l.b16 %v179
        %v235 = vunpack.c.l.b16 %v180
        %v236 = vunpack.c.l.b16 %v181
        %v237 = vunpack.c.l.b16 %v182
        %v238 = vunpack.c.l.b16 %v183
        %v239 = vunpack.c.l.b16 %v184
        %v240 = vunpack.c.l.b16 %v185
        %v241 = vunpack.c.l.b16 %v186
        %v242 = vunpack.c.l.b16 %v187
        %v243 = vunpack.c.l.b16 %v188
        %v244 = vpack.c.b16 %v229, %v228
        %v245 = vpack.c.b16 %v231, %v230
        %v246 = vpack.c.b16 %v233, %v232
        %v247 = vpack.c.b16 %v235, %v234
        %v248 = vpack.c.b16 %v237, %v236
        %v249 = vpack.c.b16 %v239, %v238
        %v250 = vpack.c.b16 %v241, %v240
        %v251 = vpack.c.b16 %v243, %v242
        %v276 = vunpack.c.l.b16 %v189
        %v277 = vunpack.c.l.b16 %v190
        %v278 = vunpack.c.l.b16 %v191
        %v279 = vunpack.c.l.b16 %v192
        %v280 = vunpack.c.l.b16 %v193
        %v281 = vunpack.c.l.b16 %v194
        %v282 = vunpack.c.l.b16 %v195
        %v283 = vunpack.c.l.b16 %v196
        %v284 = vunpack.c.l.b16 %v197
        %v285 = vunpack.c.l.b16 %v198
        %v286 = vunpack.c.l.b16 %v199
        %v287 = vunpack.c.l.b16 %v200
        %v288 = vunpack.c.l.b16 %v201
        %v289 = vunpack.c.l.b16 %v202
        %v290 = vunpack.c.l.b16 %v203
        %v291 = vunpack.c.l.b16 %v204
        %v292 = vpack.c.b16 %v277, %v276
        %v293 = vpack.c.b16 %v279, %v278
        %v294 = vpack.c.b16 %v281, %v280
        %v295 = vpack.c.b16 %v283, %v282
        %v296 = vpack.c.b16 %v285, %v284
        %v297 = vpack.c.b16 %v287, %v286
        %v298 = vpack.c.b16 %v289, %v288
        %v299 = vpack.c.b16 %v291, %v290
        %308 = vmatprep.subr.bf16.mxu0 0
        %309 = vmatpush1.bf16.msra.mxu0 %v292
        %310 = vmatprep.subr.bf16.mxu0 0
        %311 = vmatpush1.bf16.msra.mxu0 %v293
        %312 = vmatprep.subr.bf16.mxu0 0
        %313 = vmatpush1.bf16.msra.mxu0 %v294
        %314 = vmatprep.subr.bf16.mxu0 0
        %315 = vmatpush1.bf16.msra.mxu0 %v295
        %316 = vmatprep.subr.bf16.mxu0 0
        %317 = vmatpush1.bf16.msra.mxu0 %v296
        %318 = vmatprep.subr.bf16.mxu0 0
        %319 = vmatpush1.bf16.msra.mxu0 %v297
        %320 = vmatprep.subr.bf16.mxu0 0
        %321 = vmatpush1.bf16.msra.mxu0 %v298
        %322 = vmatprep.subr.bf16.mxu0 0
        %323 = vmatpush1.bf16.msra.mxu0 %v299
        %324 = vmatprep.subr.bf16.mxu0 0
        %325 = vmatpush1.bf16.msra.mxu0 0
        %326 = vmatprep.subr.bf16.mxu0 0
        %327 = vmatpush1.bf16.msra.mxu0 0
        %328 = vmatprep.subr.bf16.mxu0 0
        %329 = vmatpush1.bf16.msra.mxu0 0
        %330 = vmatprep.subr.bf16.mxu0 0
        %331 = vmatpush1.bf16.msra.mxu0 0
        %332 = vmatprep.subr.bf16.mxu0 0
        %333 = vmatpush1.bf16.msra.mxu0 0
        %334 = vmatprep.subr.bf16.mxu0 0
        %335 = vmatpush1.bf16.msra.mxu0 0
        %336 = vmatprep.subr.bf16.mxu0 0
        %337 = vmatpush1.bf16.msra.mxu0 0
        %338 = vmatprep.subr.bf16.mxu0 0
        %339 = vmatpush1.bf16.msra.mxu0 0
        %340 = vmatprep.mubr.bf16.mxu0 0
        %341 = vmatmul.mubr.bf16.gmra.mrb[0].mxu0 %v244
        %v342 = vpop.f32.mrb[0].mxu0
        %v343 = vadd.f32 %v210, %v342
        %v344 = vpop.f32.mrb[0].mxu0
        %v345 = vpop.f32.mrb[0].mxu0
        %v346 = vadd.f32 %v210, %v345
        %v347 = vpop.f32.mrb[0].mxu0
        %348 = vmatprep.mubr.bf16.mxu0 0
        %349 = vmatmul.mubr.bf16.gmra.mrb[0].mxu0 %v245
        %v350 = vpop.f32.mrb[0].mxu0
        %v351 = vadd.f32 %v210, %v350
        %v352 = vpop.f32.mrb[0].mxu0
        %v353 = vpop.f32.mrb[0].mxu0
        %v354 = vadd.f32 %v210, %v353
        %v355 = vpop.f32.mrb[0].mxu0
        %356 = vmatprep.mubr.bf16.mxu0 0
        %357 = vmatmul.mubr.bf16.gmra.mrb[0].mxu0 %v246
        %v358 = vpop.f32.mrb[0].mxu0
        %v359 = vadd.f32 %v210, %v358
        %v360 = vpop.f32.mrb[0].mxu0
        %v361 = vpop.f32.mrb[0].mxu0
        %v362 = vadd.f32 %v210, %v361
        %v363 = vpop.f32.mrb[0].mxu0
        %364 = vmatprep.mubr.bf16.mxu0 0
        %365 = vmatmul.mubr.bf16.gmra.mrb[0].mxu0 %v247
        %v366 = vpop.f32.mrb[0].mxu0
        %v367 = vadd.f32 %v210, %v366
        %v368 = vpop.f32.mrb[0].mxu0
        %v369 = vpop.f32.mrb[0].mxu0
        %v370 = vadd.f32 %v210, %v369
        %v371 = vpop.f32.mrb[0].mxu0
        %372 = vmatprep.mubr.bf16.mxu0 0
        %373 = vmatmul.mubr.bf16.gmra.mrb[0].mxu0 %v248
        %v374 = vpop.f32.mrb[0].mxu0
        %v375 = vadd.f32 %v210, %v374
        %v376 = vpop.f32.mrb[0].mxu0
        %v377 = vpop.f32.mrb[0].mxu0
        %v378 = vadd.f32 %v210, %v377
        %v379 = vpop.f32.mrb[0].mxu0
        %380 = vmatprep.mubr.bf16.mxu0 0
        %381 = vmatmul.mubr.bf16.gmra.mrb[0].mxu0 %v249
        %v382 = vpop.f32.mrb[0].mxu0
        %v383 = vadd.f32 %v210, %v382
        %v384 = vpop.f32.mrb[0].mxu0
        %v385 = vpop.f32.mrb[0].mxu0
        %v386 = vadd.f32 %v210, %v385
        %v387 = vpop.f32.mrb[0].mxu0
        %388 = vmatprep.mubr.bf16.mxu0 0
        %389 = vmatmul.mubr.bf16.gmra.mrb[0].mxu0 %v250
        %v390 = vpop.f32.mrb[0].mxu0
        %v391 = vadd.f32 %v210, %v390
        %v392 = vpop.f32.mrb[0].mxu0
        %v393 = vpop.f32.mrb[0].mxu0
        %v394 = vadd.f32 %v210, %v393
        %v395 = vpop.f32.mrb[0].mxu0
        %396 = vmatprep.mubr.bf16.mxu0 0
        %397 = vmatmul.mubr.bf16.gmra.mrb[0].mxu0 %v251
        %v398 = vpop.f32.mrb[0].mxu0
        %v399 = vadd.f32 %v210, %v398
        %v400 = vpop.f32.mrb[0].mxu0
        %v401 = vpop.f32.mrb[0].mxu0
        %v402 = vadd.f32 %v210, %v401
        %v403 = vpop.f32.mrb[0].mxu0
        %404 = vdwg.mxu0
        %v405 = vmax.f32 %v343, 0.0
        %v406 = vmax.f32 %v346, 0.0
        %v407 = vmax.f32 %v351, 0.0
        %v408 = vmax.f32 %v354, 0.0
        %v409 = vmax.f32 %v359, 0.0
        %v410 = vmax.f32 %v362, 0.0
        %v411 = vmax.f32 %v367, 0.0
        %v412 = vmax.f32 %v370, 0.0
        %v413 = vmax.f32 %v375, 0.0
        %v414 = vmax.f32 %v378, 0.0
        %v415 = vmax.f32 %v383, 0.0
        %v416 = vmax.f32 %v386, 0.0
        %v417 = vmax.f32 %v391, 0.0
        %v418 = vmax.f32 %v394, 0.0
        %v419 = vmax.f32 %v399, 0.0
        %v420 = vmax.f32 %v402, 0.0
        %v421 = vpack.c.bf16 %v406, %v405
        %v422 = vpack.c.bf16 %v408, %v407
        %v423 = vpack.c.bf16 %v410, %v409
        %v424 = vpack.c.bf16 %v412, %v411
        %v425 = vpack.c.bf16 %v414, %v413
        %v426 = vpack.c.bf16 %v416, %v415
        %v427 = vpack.c.bf16 %v418, %v417
        %v428 = vpack.c.bf16 %v420, %v419
        %v437 = vunpack.c.l.b16 %v421
        %v438 = vunpack.c.h.b16 %v421
        %v439 = vunpack.c.l.b16 %v422
        %v440 = vunpack.c.h.b16 %v422
        %v441 = vunpack.c.l.b16 %v423
        %v442 = vunpack.c.h.b16 %v423
        %v443 = vunpack.c.l.b16 %v424
        %v444 = vunpack.c.h.b16 %v424
        %v445 = vunpack.c.l.b16 %v425
        %v446 = vunpack.c.h.b16 %v425
        %v447 = vunpack.c.l.b16 %v426
        %v448 = vunpack.c.h.b16 %v426
        %v449 = vunpack.c.l.b16 %v427
        %v450 = vunpack.c.h.b16 %v427
        %v451 = vunpack.c.l.b16 %v428
        %v452 = vunpack.c.h.b16 %v428
        %v453 = vpack.c.b16 %v437, %v437
        %v454 = vpack.c.b16 %v438, %v438
        %v455 = vpack.c.b16 %v439, %v439
        %v456 = vpack.c.b16 %v440, %v440
        %v457 = vpack.c.b16 %v441, %v441
        %v458 = vpack.c.b16 %v442, %v442
        %v459 = vpack.c.b16 %v443, %v443
        %v460 = vpack.c.b16 %v444, %v444
        %v461 = vpack.c.b16 %v445, %v445
        %v462 = vpack.c.b16 %v446, %v446
        %v463 = vpack.c.b16 %v447, %v447
        %v464 = vpack.c.b16 %v448, %v448
        %v465 = vpack.c.b16 %v449, %v449
        %v466 = vpack.c.b16 %v450, %v450
        %v467 = vpack.c.b16 %v451, %v451
        %v468 = vpack.c.b16 %v452, %v452
        %485 = vst [vmem:[%s164] sm:$0xf] %v453
        %486 = vst [vmem:[%s164 + $0x4] sm:$0xf] %v454
        %487 = vst [vmem:[%s164 + $0x8] sm:$0xf] %v455
        %488 = vst [vmem:[%s164 + $0xc] sm:$0xf] %v456
        %489 = vst [vmem:[%s164 + $0x10] sm:$0xf] %v457
        %490 = vst [vmem:[%s164 + $0x14] sm:$0xf] %v458
        %491 = vst [vmem:[%s164 + $0x18] sm:$0xf] %v459
        %492 = vst [vmem:[%s164 + $0x1c] sm:$0xf] %v460
        %493 = vst [vmem:[%s164 + $0x20] sm:$0xf] %v461
        %494 = vst [vmem:[%s164 + $0x24] sm:$0xf] %v462
        %495 = vst [vmem:[%s164 + $0x28] sm:$0xf] %v463
        %496 = vst [vmem:[%s164 + $0x2c] sm:$0xf] %v464
        %497 = vst [vmem:[%s164 + $0x30] sm:$0xf] %v465
        %498 = vst [vmem:[%s164 + $0x34] sm:$0xf] %v466
        %499 = vst [vmem:[%s164 + $0x38] sm:$0xf] %v467
        %500 = vst [vmem:[%s164 + $0x3c] sm:$0xf] %v468
        %s501 = sand.u32 %s93, 1
        %s502 = scalar_lea.sflag [#allocation3], %s501
        %s503 = sand.u32 %s93, 1
        %s504 = smul.addr %s503, 64
        %s505 = scalar_lea.vmem [#allocation2], %s504
        // Predicated region
        $region33: #{net_forward.3} parent=31 // pred_check
          %p506 = pneg %p103
        $region34: #{net_forward.3} parent=31 // pred_check_branch
          %508 = sbr.rel (%p506) target = $region36
        $region35: #{net_forward.3} parent=31 // pred_region
          %s509 = smul.u32 16, %s17
          %s511 = ssub.s32 1024, 1024
          %512 = vsyncadd %s502, %s511
          %s513 = smul.addr %s509, 64
          %s514 = scalar_lea.hbm %s3, %s513
          %s515 = sshll.u32 %s505, 4
          %s516 = int_to_ptr.vmem [resolvable:$true] %s515
          %521 = dma.vmem_to_hbm [thread:$0]  %s516, 1024, %s514, %s502, 64, 64, 4
        $region36: #{net_forward.3} parent=31 // pred_fallthru
          _
      $region32: #{net_forward.3} parent=5 // pred_fallthru
        _
      %p522 = scmp.le.s32.totalorder 2, %s12
      // Predicated region
      $region37: #{net_forward.3} parent=5 // pred_check
        %p523 = pneg %p522
      $region38: #{net_forward.3} parent=5 // pred_check_branch
        %525 = sbr.rel (%p523) target = $region40
      $region39: #{net_forward.3} parent=5 // pred_region
        %s526 = ssub.s32 %s12, 2
        // Predicated region
        $region41: #{net_forward.3} parent=39 // pred_check
          %p527 = pneg %p109
        $region42: #{net_forward.3} parent=39 // pred_check_branch
          %529 = sbr.rel (%p527) target = $region44
        $region43: #{net_forward.3} parent=39 // pred_region
          %s530 = sand.u32 %s94, 1
          %s531 = scalar_lea.sflag [#allocation3], %s530
          %s532 = sand.u32 %s94, 1
          %s533 = smul.addr %s532, 64
          %s534 = scalar_lea.vmem [#allocation2], %s533
          %535 = dma.done %s531, 1024
        $region44: #{net_forward.3} parent=39 // pred_fallthru
          _
      $region40: #{net_forward.3} parent=5 // pred_fallthru
        _
    $region6: #{net_forward.3} parent=1 // loop_footer
      %s16 = sadd.s32 1, %s12
    $region7: #{net_forward.3} parent=1 // loop_footer_branch
      %11 = sbr.rel target = $region3
    $region8: #{net_forward.3} parent=1 // loop_exit
      _
    %536 = vsyncpa [#allocation3], 1
    %s537 = scalar_lea.sflag [#allocation3], 1
    %538 = vsyncpa %s537, 1

// kernel: net_forward.4
$region0: #{net_forward.4}
  #allocation0 [shape = 'u32[]', space=smem, size = 0x4, offset = 0x4, fixed_abs, tag = 'smem constant byte address 0x4 - core index']
  #allocation1 [shape = 'u32[144,128]{1,0:T(1,128)}', space=vmem, size = 0x12000, scoped, tag = 'internal scratch']
  #allocation2 [shape = 'bf16[2,256,128]{2,1,0:T(16,128)(2,1)}', space=vmem, size = 0x20000, scoped, tag = 'scratch operand']
  #allocation3 [shape = 's32[1]{0}', space=sflag, size = 0x4, scoped, tag = 'scratch operand']
  #allocation11 [shape = 's32[]', space=sflag, size = 0x4, offset = 0, fixed_abs, tag = 'sflag constant byte address 0x0 - dummy sync flag']
  #allocation12 [shape = 's32[]', space=sflag, size = 0x4, offset = 0, fixed_abs, tag = 'sflag constant byte address 0x0 - dummy sync flag']
  #allocation13 [shape = 'u32[]', space=smem, size = 0x4, offset = 0x44, fixed_abs, tag = 'smem constant byte address 0x44 - assertion arg 0']
  #allocation14 [shape = 'u32[]', space=smem, size = 0x4, offset = 0x48, fixed_abs, tag = 'smem constant byte address 0x48 - assertion arg 1']
  %s0 = inlined_call_operand.hbm [shape: f32[3], index: 0, kind: input, shape index: {}]
  %s1 = inlined_call_operand.hbm [shape: bf16[256,256], index: 1, kind: input, shape index: {}]
  %s2 = inlined_call_operand.hbm [shape: bf16[256,128], index: 2, kind: input, shape index: {}]
  %s3 = inlined_call_operand.hbm [shape: bf16[3,128,128], index: 3, kind: input, shape index: {}]
  %s4 = inlined_call_operand.hbm [shape: bf16[256,128], index: 4, kind: output, shape index: {}]
  %s5 = sld [smem:[#allocation0]]
  $region69: #{net_forward.4} parent=0
    _
  %s7 = ssub.s32 1, %s5
  %s8 = scalar_select 0, %s7, %s5
  $region1: #{net_forward.4} parent=0
    #allocation4 [shape = 'u8[512]{0}', space=smem, size = 0x200, scoped, tag = 'input window, operand 0, single buffered']
    #allocation5 [shape = 's32[2]{0}', space=sflag, size = 0x8, scoped, tag = 'scoped memory for net_forward.4']
    #allocation6 [shape = 's32[2]{0}', space=sflag, size = 0x8, scoped, tag = 'scoped memory for net_forward.4']
    #allocation7 [shape = 'u8[131072]{0}', space=vmem, size = 0x20000, scoped, tag = 'input window, operand 1, single buffered']
    #allocation8 [shape = 'u8[65536]{0}', space=vmem, size = 0x10000, scoped, tag = 'input window, operand 2, single buffered']
    #allocation9 [shape = 's32[1]{0}', space=sflag, size = 0x4, scoped, tag = 'scoped memory for net_forward.4']
    #allocation10 [shape = 'u8[65536]{0}', space=vmem, size = 0x10000, scoped, tag = 'input window, operand 3']
    %9 = vsyncpa [#allocation6], 0
    %10 = vsyncpa [#allocation5], 0
    %11 = vsyncpa [#allocation9], 0
    loop: start=0, step=1, limit=7
    $region2: #{net_forward.4} parent=1 // loop_pre_header
      _
    $region3: #{net_forward.4} parent=1 // loop_header
      %s13 = sphi 0, %s17
      %p14 = scmp.ge.s32.totalorder %s13, 7
      %s19 = sphi 0, %s29
      %s20 = sphi 0, %s25
      %s21 = sphi 0, %s19
      %s22 = sphi 0, %s20
      %s30 = sphi 0, %s30
      %s32 = sphi 0, %s30
      %s40 = sphi 0, %s32
      %s44 = sphi 0, %s44
      %s46 = sphi 0, %s44
      %s54 = sphi 0, %s46
      %s58 = sphi 0, %s58
      %s60 = sphi 0, %s58
      %s68 = sphi 0, %s60
      %s74 = sphi 0, %s76
      %s77 = sphi 0, %s74
      %s87 = sphi 0, %s77
    $region4: #{net_forward.4} parent=1 // loop_header_branch
      %16 = sbr.rel (%p14) target = $region8
    $region5: #{net_forward.4} parent=1 // loop_body
      %s18 = ssub.s32 %s13, 1
      %s23 = sadd.s32 1, %s20
      %p24 = scmp.ge.s32.totalorder %s23, 2
      %s25 = scalar_select %p24, 0, %s23
      %s26 = sadd.s32 1, %s19
      %s27 = scalar_select %p24, %s26, %s19
      %p28 = scmp.ge.s32.totalorder %s27, 3
      %s29 = scalar_select %p28, 0, %s27
      %s31 = sadd.s32 %s30, 1
      %p33 = scmp.eq.s32.totalorder %s13, 5
      %p34 = scmp.ne.s32.totalorder %s30, %s32
      %p35 = scmp.eq.s32.totalorder %s13, 0
      %p36 = por %p34, %p35
      %p37 = scmp.ne.s32.totalorder %s30, %s32
      %p38 = scmp.eq.s32.totalorder %s18, 5
      %p39 = por %p37, %p38
      %p41 = scmp.ne.s32.totalorder %s32, %s40
      %p42 = scmp.eq.s32.totalorder %s18, 0
      %p43 = por %p41, %p42
      %s45 = sadd.s32 %s44, 1
      %p47 = scmp.eq.s32.totalorder %s13, 5
      %p48 = scmp.ne.s32.totalorder %s44, %s46
      %p49 = scmp.eq.s32.totalorder %s13, 0
      %p50 = por %p48, %p49
      %p51 = scmp.ne.s32.totalorder %s44, %s46
      %p52 = scmp.eq.s32.totalorder %s18, 5
      %p53 = por %p51, %p52
      %p55 = scmp.ne.s32.totalorder %s46, %s54
      %p56 = scmp.eq.s32.totalorder %s18, 0
      %p57 = por %p55, %p56
      %s59 = sadd.s32 %s58, 1
      %p61 = scmp.eq.s32.totalorder %s13, 5
      %p62 = scmp.ne.s32.totalorder %s58, %s60
      %p63 = scmp.eq.s32.totalorder %s13, 0
      %p64 = por %p62, %p63
      %p65 = scmp.ne.s32.totalorder %s58, %s60
      %p66 = scmp.eq.s32.totalorder %s18, 5
      %p67 = por %p65, %p66
      %p69 = scmp.ne.s32.totalorder %s60, %s68
      %p70 = scmp.eq.s32.totalorder %s18, 0
      %p71 = por %p69, %p70
      %s72 = ssub.s32 %s19, %s29
      %p73 = scmp.eq.s32.totalorder %s72, 0
      %s75 = sadd.s32 %s74, 1
      %s76 = scalar_select %p73, %s74, %s75
      %p78 = pneg %p73
      %p79 = scmp.eq.s32.totalorder %s13, 5
      %p80 = por %p78, %p79
      %p81 = scmp.ne.s32.totalorder %s74, %s77
      %p82 = scmp.eq.s32.totalorder %s13, 0
      %p83 = por %p81, %p82
      %p84 = scmp.ne.s32.totalorder %s74, %s77
      %p85 = scmp.eq.s32.totalorder %s18, 5
      %p86 = por %p84, %p85
      %p88 = scmp.ne.s32.totalorder %s77, %s87
      %p89 = scmp.eq.s32.totalorder %s18, 0
      %p90 = por %p88, %p89
      %p91 = scmp.le.s32.totalorder 1, %s13
      // Predicated region
      $region9: #{net_forward.4} parent=5 // pred_check
        %p92 = pneg %p91
      $region10: #{net_forward.4} parent=5 // pred_check_branch
        %94 = sbr.rel (%p92) target = $region12
      $region11: #{net_forward.4} parent=5 // pred_region
        %s95 = ssub.s32 %s13, 1
        // Predicated region
        $region13: #{net_forward.4} parent=11 // pred_check
          %p96 = pneg %p43
        $region14: #{net_forward.4} parent=11 // pred_check_branch
          %98 = sbr.rel (%p96) target = $region16
        $region15: #{net_forward.4} parent=11 // pred_region
          %s100 = ssub.s32 16, 16
          %101 = vsyncadd [#allocation6], %s100
          %104 = dma.hbm_to_smem %s0, 16, [#allocation4], [#allocation6]
        $region16: #{net_forward.4} parent=11 // pred_fallthru
          _
        // Predicated region
        $region17: #{net_forward.4} parent=11 // pred_check
          %p105 = pneg %p57
        $region18: #{net_forward.4} parent=11 // pred_check_branch
          %107 = sbr.rel (%p105) target = $region20
        $region19: #{net_forward.4} parent=11 // pred_region
          %s109 = ssub.s32 4096, 4096
          %110 = vsyncadd [#allocation5], %s109
          %s111 = sshll.u32 [#allocation7], 4
          %s112 = int_to_ptr.vmem [resolvable:$true] %s111
          %117 = dma.hbm_to_vmem [thread:$0]  %s1, 4096, %s112, [#allocation5], 128, 128, 8
        $region20: #{net_forward.4} parent=11 // pred_fallthru
          _
        // Predicated region
        $region21: #{net_forward.4} parent=11 // pred_check
          %p118 = pneg %p71
        $region22: #{net_forward.4} parent=11 // pred_check_branch
          %120 = sbr.rel (%p118) target = $region24
        $region23: #{net_forward.4} parent=11 // pred_region
          %s122 = ssub.s32 2048, 2048
          %123 = vsyncadd [#allocation9], %s122
          %s124 = sshll.u32 [#allocation8], 4
          %s125 = int_to_ptr.vmem [resolvable:$true] %s124
          %130 = dma.hbm_to_vmem [thread:$0]  %s2, 2048, %s125, [#allocation9], 64, 64, 4
        $region24: #{net_forward.4} parent=11 // pred_fallthru
          _
      $region12: #{net_forward.4} parent=5 // pred_fallthru
        _
      %p131 = scmp.lt.s32.totalorder %s13, 6
      // Predicated region
      $region25: #{net_forward.4} parent=5 // pred_check
        %p132 = pneg %p131
      $region26: #{net_forward.4} parent=5 // pred_check_branch
        %134 = sbr.rel (%p132) target = $region28
      $region27: #{net_forward.4} parent=5 // pred_region
        // Predicated region
        $region29: #{net_forward.4} parent=27 // pred_check
          %p135 = pneg %p83
        $region30: #{net_forward.4} parent=27 // pred_check_branch
          %137 = sbr.rel (%p135) target = $region32
        $region31: #{net_forward.4} parent=27 // pred_region
          %s138 = sand.u32 %s13, 1
          %s139 = scalar_lea.sflag [#allocation5], %s138
          %s140 = sand.u32 %s74, 1
          %s141 = smul.addr %s140, 64
          %s142 = scalar_lea.vmem [#allocation10], %s141
          %s144 = ssub.s32 1024, 1024
          %145 = vsyncadd %s139, %s144
          %s146 = smul.addr %s19, 16
          %s147 = smul.addr %s146, 64
          %s148 = scalar_lea.hbm %s3, %s147
          %s149 = sshll.u32 %s142, 4
          %s150 = int_to_ptr.vmem [resolvable:$true] %s149
          %155 = dma.hbm_to_vmem [thread:$0]  %s148, 1024, %s150, %s139, 64, 64, 4
        $region32: #{net_forward.4} parent=27 // pred_fallthru
          _
      $region28: #{net_forward.4} parent=5 // pred_fallthru
        _
      %p156 = scmp.le.s32.totalorder 1, %s13
      // Predicated region
      $region33: #{net_forward.4} parent=5 // pred_check
        %p157 = pneg %p156
      $region34: #{net_forward.4} parent=5 // pred_check_branch
        %159 = sbr.rel (%p157) target = $region36
      $region35: #{net_forward.4} parent=5 // pred_region
        %s160 = ssub.s32 %s13, 1
        // Predicated region
        $region37: #{net_forward.4} parent=35 // pred_check
          %p161 = pneg %p43
        $region38: #{net_forward.4} parent=35 // pred_check_branch
          %163 = sbr.rel (%p161) target = $region40
        $region39: #{net_forward.4} parent=35 // pred_region
          %164 = dma.done [#allocation6], 16
        $region40: #{net_forward.4} parent=35 // pred_fallthru
          _
        // Predicated region
        $region41: #{net_forward.4} parent=35 // pred_check
          %p165 = pneg %p57
        $region42: #{net_forward.4} parent=35 // pred_check_branch
          %167 = sbr.rel (%p165) target = $region44
        $region43: #{net_forward.4} parent=35 // pred_region
          %168 = dma.done [#allocation5], 4096
        $region44: #{net_forward.4} parent=35 // pred_fallthru
          _
        // Predicated region
        $region45: #{net_forward.4} parent=35 // pred_check
          %p169 = pneg %p71
        $region46: #{net_forward.4} parent=35 // pred_check_branch
          %171 = sbr.rel (%p169) target = $region48
        $region47: #{net_forward.4} parent=35 // pred_region
          %172 = dma.done [#allocation9], 2048
        $region48: #{net_forward.4} parent=35 // pred_fallthru
          _
        %s173 = sand.u32 %s18, 1
        %s174 = scalar_lea.sflag [#allocation5], %s173
        %s175 = sand.u32 %s77, 1
        %s176 = smul.addr %s175, 64
        %s177 = scalar_lea.vmem [#allocation10], %s176
        // Predicated region
        $region49: #{net_forward.4} parent=35 // pred_check
          %p178 = pneg %p90
        $region50: #{net_forward.4} parent=35 // pred_check_branch
          %180 = sbr.rel (%p178) target = $region52
        $region51: #{net_forward.4} parent=35 // pred_region
          %181 = dma.done %s174, 1024
        $region52: #{net_forward.4} parent=35 // pred_fallthru
          _
        %182 = sfence
        %p183 = pneg %p43
        %p184 = pneg %p39
        %p185 = pneg %p57
        %p186 = pneg %p53
        %p187 = pneg %p71
        %p188 = pneg %p67
        %s189 = sand.u32 %s18, 1
        %s190 = scalar_lea.sflag [#allocation5], %s189
        %s191 = sand.u32 %s77, 1
        %s192 = smul.addr %s191, 64
        %s193 = scalar_lea.vmem [#allocation10], %s192
        %p194 = pneg %p90
        %p195 = pneg %p86
        %s197 = smul.u32 %s22, 128
        %s198 = sshra.s32 %s197, 3
        %s199 = sand.u32 %s197, 7
        %s200 = smul.u32 %s198, 2
        %s201 = smul.addr %s200, 4
        %s202 = scalar_lea.vmem [#allocation7], %s201
        %v203 = vld [vmem:[%s202] sm:$0xff]
        %v204 = vld [vmem:[%s202 + $0x8] sm:$0xff]
        %v205 = vld [vmem:[%s202 + $0x10] sm:$0xff]
        %v206 = vld [vmem:[%s202 + $0x18] sm:$0xff]
        %v207 = vld [vmem:[%s202 + $0x20] sm:$0xff]
        %v208 = vld [vmem:[%s202 + $0x28] sm:$0xff]
        %v209 = vld [vmem:[%s202 + $0x30] sm:$0xff]
        %v210 = vld [vmem:[%s202 + $0x38] sm:$0xff]
        %v211 = vld [vmem:[%s202 + $0x40] sm:$0xff]
        %v212 = vld [vmem:[%s202 + $0x48] sm:$0xff]
        %v213 = vld [vmem:[%s202 + $0x50] sm:$0xff]
        %v214 = vld [vmem:[%s202 + $0x58] sm:$0xff]
        %v215 = vld [vmem:[%s202 + $0x60] sm:$0xff]
        %v216 = vld [vmem:[%s202 + $0x68] sm:$0xff]
        %v217 = vld [vmem:[%s202 + $0x70] sm:$0xff]
        %v218 = vld [vmem:[%s202 + $0x78] sm:$0xff]
        %s219 = sld [smem:[#allocation4 + %s21]]
        %v220 = vld [vmem:[%s177] sm:$0xf]
        %v221 = vld [vmem:[%s177 + $0x4] sm:$0xf]
        %v222 = vld [vmem:[%s177 + $0x8] sm:$0xf]
        %v223 = vld [vmem:[%s177 + $0xc] sm:$0xf]
        %v224 = vld [vmem:[%s177 + $0x10] sm:$0xf]
        %v225 = vld [vmem:[%s177 + $0x14] sm:$0xf]
        %v226 = vld [vmem:[%s177 + $0x18] sm:$0xf]
        %v227 = vld [vmem:[%s177 + $0x1c] sm:$0xf]
        %v228 = vld [vmem:[%s177 + $0x20] sm:$0xf]
        %v229 = vld [vmem:[%s177 + $0x24] sm:$0xf]
        %v230 = vld [vmem:[%s177 + $0x28] sm:$0xf]
        %v231 = vld [vmem:[%s177 + $0x2c] sm:$0xf]
        %v232 = vld [vmem:[%s177 + $0x30] sm:$0xf]
        %v233 = vld [vmem:[%s177 + $0x34] sm:$0xf]
        %v234 = vld [vmem:[%s177 + $0x38] sm:$0xf]
        %v235 = vld [vmem:[%s177 + $0x3c] sm:$0xf]
        %s236 = sadd.s32 %s21, 1
        %p237 = scmp.lt.s32.totalorder %s236, 0
        %s238 = ssub.s32 0, %s236
        %s239 = scalar_select %p237, %s238, %s236
        %s240 = sand.u32 %s239, 1
        %s241 = ssub.s32 0, %s240
        %s242 = scalar_select %p237, %s241, %s240
        %p243 = scmp.ne.s32.totalorder %s242, 0
        %p244 = scmp.lt.s32.totalorder %s242, 0
        %p245 = pnand %p244, %p243
        %p246 = pneg %p245
        %s247 = sadd.s32 %s242, 2
        %s248 = scalar_select %p246, %s247, %s242
        %p249 = scmp.eq.s32.totalorder %s21, 0
        // Predicated region
        $region53: #{net_forward.4} parent=35 // pred_check
          %p250 = pneg %p249
        $region54: #{net_forward.4} parent=35 // pred_check_branch
          %252 = sbr.rel (%p250) target = $region56
        $region55: #{net_forward.4} parent=35 // pred_region
          %v253 = vld [vmem:[#allocation8] sm:$0xf]
          %v254 = vld [vmem:[#allocation8 + $0x4] sm:$0xf]
          %v255 = vld [vmem:[#allocation8 + $0x8] sm:$0xf]
          %v256 = vld [vmem:[#allocation8 + $0xc] sm:$0xf]
          %v257 = vld [vmem:[#allocation8 + $0x10] sm:$0xf]
          %v258 = vld [vmem:[#allocation8 + $0x14] sm:$0xf]
          %v259 = vld [vmem:[#allocation8 + $0x18] sm:$0xf]
          %v260 = vld [vmem:[#allocation8 + $0x1c] sm:$0xf]
          %v261 = vld [vmem:[#allocation8 + $0x20] sm:$0xf]
          %v262 = vld [vmem:[#allocation8 + $0x24] sm:$0xf]
          %v263 = vld [vmem:[#allocation8 + $0x28] sm:$0xf]
          %v264 = vld [vmem:[#allocation8 + $0x2c] sm:$0xf]
          %v265 = vld [vmem:[#allocation8 + $0x30] sm:$0xf]
          %v266 = vld [vmem:[#allocation8 + $0x34] sm:$0xf]
          %v267 = vld [vmem:[#allocation8 + $0x38] sm:$0xf]
          %v268 = vld [vmem:[#allocation8 + $0x3c] sm:$0xf]
          %v269 = vld [vmem:[#allocation8 + $0x40] sm:$0xf]
          %v270 = vld [vmem:[#allocation8 + $0x44] sm:$0xf]
          %v271 = vld [vmem:[#allocation8 + $0x48] sm:$0xf]
          %v272 = vld [vmem:[#allocation8 + $0x4c] sm:$0xf]
          %v273 = vld [vmem:[#allocation8 + $0x50] sm:$0xf]
          %v274 = vld [vmem:[#allocation8 + $0x54] sm:$0xf]
          %v275 = vld [vmem:[#allocation8 + $0x58] sm:$0xf]
          %v276 = vld [vmem:[#allocation8 + $0x5c] sm:$0xf]
          %v277 = vld [vmem:[#allocation8 + $0x60] sm:$0xf]
          %v278 = vld [vmem:[#allocation8 + $0x64] sm:$0xf]
          %v279 = vld [vmem:[#allocation8 + $0x68] sm:$0xf]
          %v280 = vld [vmem:[#allocation8 + $0x6c] sm:$0xf]
          %v281 = vld [vmem:[#allocation8 + $0x70] sm:$0xf]
          %v282 = vld [vmem:[#allocation8 + $0x74] sm:$0xf]
          %v283 = vld [vmem:[#allocation8 + $0x78] sm:$0xf]
          %v284 = vld [vmem:[#allocation8 + $0x7c] sm:$0xf]
          %v301 = vunpack.c.l.b16 %v203
          %v302 = vunpack.c.h.b16 %v203
          %v303 = vunpack.c.l.b16 %v204
          %v304 = vunpack.c.h.b16 %v204
          %v305 = vunpack.c.l.b16 %v205
          %v306 = vunpack.c.h.b16 %v205
          %v307 = vunpack.c.l.b16 %v206
          %v308 = vunpack.c.h.b16 %v206
          %v309 = vunpack.c.l.b16 %v207
          %v310 = vunpack.c.h.b16 %v207
          %v311 = vunpack.c.l.b16 %v208
          %v312 = vunpack.c.h.b16 %v208
          %v313 = vunpack.c.l.b16 %v209
          %v314 = vunpack.c.h.b16 %v209
          %v315 = vunpack.c.l.b16 %v210
          %v316 = vunpack.c.h.b16 %v210
          %v317 = vunpack.c.l.b16 %v211
          %v318 = vunpack.c.h.b16 %v211
          %v319 = vunpack.c.l.b16 %v212
          %v320 = vunpack.c.h.b16 %v212
          %v321 = vunpack.c.l.b16 %v213
          %v322 = vunpack.c.h.b16 %v213
          %v323 = vunpack.c.l.b16 %v214
          %v324 = vunpack.c.h.b16 %v214
          %v325 = vunpack.c.l.b16 %v215
          %v326 = vunpack.c.h.b16 %v215
          %v327 = vunpack.c.l.b16 %v216
          %v328 = vunpack.c.h.b16 %v216
          %v329 = vunpack.c.l.b16 %v217
          %v330 = vunpack.c.h.b16 %v217
          %v331 = vunpack.c.l.b16 %v218
          %v332 = vunpack.c.h.b16 %v218
          %v333 = vpack.c.b16 %v303, %v301
          %v334 = vpack.c.b16 %v304, %v302
          %v335 = vpack.c.b16 %v307, %v305
          %v336 = vpack.c.b16 %v308, %v306
          %v337 = vpack.c.b16 %v311, %v309
          %v338 = vpack.c.b16 %v312, %v310
          %v339 = vpack.c.b16 %v315, %v313
          %v340 = vpack.c.b16 %v316, %v314
          %v341 = vpack.c.b16 %v319, %v317
          %v342 = vpack.c.b16 %v320, %v318
          %v343 = vpack.c.b16 %v323, %v321
          %v344 = vpack.c.b16 %v324, %v322
          %v345 = vpack.c.b16 %v327, %v325
          %v346 = vpack.c.b16 %v328, %v326
          %v347 = vpack.c.b16 %v331, %v329
          %v348 = vpack.c.b16 %v332, %v330
          %v397 = vunpack.c.l.b16 %v253
          %v398 = vunpack.c.l.b16 %v254
          %v399 = vunpack.c.l.b16 %v255
          %v400 = vunpack.c.l.b16 %v256
          %v401 = vunpack.c.l.b16 %v257
          %v402 = vunpack.c.l.b16 %v258
          %v403 = vunpack.c.l.b16 %v259
          %v404 = vunpack.c.l.b16 %v260
          %v405 = vunpack.c.l.b16 %v261
          %v406 = vunpack.c.l.b16 %v262
          %v407 = vunpack.c.l.b16 %v263
          %v408 = vunpack.c.l.b16 %v264
          %v409 = vunpack.c.l.b16 %v265
          %v410 = vunpack.c.l.b16 %v266
          %v411 = vunpack.c.l.b16 %v267
          %v412 = vunpack.c.l.b16 %v268
          %v413 = vunpack.c.l.b16 %v269
          %v414 = vunpack.c.l.b16 %v270
          %v415 = vunpack.c.l.b16 %v271
          %v416 = vunpack.c.l.b16 %v272
          %v417 = vunpack.c.l.b16 %v273
          %v418 = vunpack.c.l.b16 %v274
          %v419 = vunpack.c.l.b16 %v275
          %v420 = vunpack.c.l.b16 %v276
          %v421 = vunpack.c.l.b16 %v277
          %v422 = vunpack.c.l.b16 %v278
          %v423 = vunpack.c.l.b16 %v279
          %v424 = vunpack.c.l.b16 %v280
          %v425 = vunpack.c.l.b16 %v281
          %v426 = vunpack.c.l.b16 %v282
          %v427 = vunpack.c.l.b16 %v283
          %v428 = vunpack.c.l.b16 %v284
          %v429 = vpack.c.b16 %v398, %v397
          %v430 = vpack.c.b16 %v400, %v399
          %v431 = vpack.c.b16 %v402, %v401
          %v432 = vpack.c.b16 %v404, %v403
          %v433 = vpack.c.b16 %v406, %v405
          %v434 = vpack.c.b16 %v408, %v407
          %v435 = vpack.c.b16 %v410, %v409
          %v436 = vpack.c.b16 %v412, %v411
          %v437 = vpack.c.b16 %v414, %v413
          %v438 = vpack.c.b16 %v416, %v415
          %v439 = vpack.c.b16 %v418, %v417
          %v440 = vpack.c.b16 %v420, %v419
          %v441 = vpack.c.b16 %v422, %v421
          %v442 = vpack.c.b16 %v424, %v423
          %v443 = vpack.c.b16 %v426, %v425
          %v444 = vpack.c.b16 %v428, %v427
          %461 = vmatprep.subr.bf16.mxu0 0
          %462 = vmatpush1.bf16.msra.mxu0 %v429
          %463 = vmatprep.subr.bf16.mxu0 0
          %464 = vmatpush1.bf16.msra.mxu0 %v430
          %465 = vmatprep.subr.bf16.mxu0 0
          %466 = vmatpush1.bf16.msra.mxu0 %v431
          %467 = vmatprep.subr.bf16.mxu0 0
          %468 = vmatpush1.bf16.msra.mxu0 %v432
          %469 = vmatprep.subr.bf16.mxu0 0
          %470 = vmatpush1.bf16.msra.mxu0 %v433
          %471 = vmatprep.subr.bf16.mxu0 0
          %472 = vmatpush1.bf16.msra.mxu0 %v434
          %473 = vmatprep.subr.bf16.mxu0 0
          %474 = vmatpush1.bf16.msra.mxu0 %v435
          %475 = vmatprep.subr.bf16.mxu0 0
          %476 = vmatpush1.bf16.msra.mxu0 %v436
          %477 = vmatprep.subr.bf16.mxu0 0
          %478 = vmatpush1.bf16.msra.mxu0 %v437
          %479 = vmatprep.subr.bf16.mxu0 0
          %480 = vmatpush1.bf16.msra.mxu0 %v438
          %481 = vmatprep.subr.bf16.mxu0 0
          %482 = vmatpush1.bf16.msra.mxu0 %v439
          %483 = vmatprep.subr.bf16.mxu0 0
          %484 = vmatpush1.bf16.msra.mxu0 %v440
          %485 = vmatprep.subr.bf16.mxu0 0
          %486 = vmatpush1.bf16.msra.mxu0 %v441
          %487 = vmatprep.subr.bf16.mxu0 0
          %488 = vmatpush1.bf16.msra.mxu0 %v442
          %489 = vmatprep.subr.bf16.mxu0 0
          %490 = vmatpush1.bf16.msra.mxu0 %v443
          %491 = vmatprep.subr.bf16.mxu0 0
          %492 = vmatpush1.bf16.msra.mxu0 %v444
          %493 = vmatprep.mubr.bf16.mxu0 %v334
          %494 = vmatmul.mubr.bf16.gmra.mrb[0].mxu0 %v333
          %v495 = vpop.f32.mrb[0].mxu0
          %v496 = vadd.f32 0.0, %v495
          %v497 = vpop.f32.mrb[0].mxu0
          %v498 = vpop.f32.mrb[0].mxu0
          %v499 = vadd.f32 0.0, %v498
          %v500 = vpop.f32.mrb[0].mxu0
          %501 = vmatprep.mubr.bf16.mxu0 %v336
          %502 = vmatmul.mubr.bf16.gmra.mrb[0].mxu0 %v335
          %v503 = vpop.f32.mrb[0].mxu0
          %v504 = vadd.f32 0.0, %v503
          %v505 = vpop.f32.mrb[0].mxu0
          %v506 = vpop.f32.mrb[0].mxu0
          %v507 = vadd.f32 0.0, %v506
          %v508 = vpop.f32.mrb[0].mxu0
          %509 = vmatprep.mubr.bf16.mxu0 %v338
          %510 = vmatmul.mubr.bf16.gmra.mrb[0].mxu0 %v337
          %v511 = vpop.f32.mrb[0].mxu0
          %v512 = vadd.f32 0.0, %v511
          %v513 = vpop.f32.mrb[0].mxu0
          %v514 = vpop.f32.mrb[0].mxu0
          %v515 = vadd.f32 0.0, %v514
          %v516 = vpop.f32.mrb[0].mxu0
          %517 = vmatprep.mubr.bf16.mxu0 %v340
          %518 = vmatmul.mubr.bf16.gmra.mrb[0].mxu0 %v339
          %v519 = vpop.f32.mrb[0].mxu0
          %v520 = vadd.f32 0.0, %v519
          %v521 = vpop.f32.mrb[0].mxu0
          %v522 = vpop.f32.mrb[0].mxu0
          %v523 = vadd.f32 0.0, %v522
          %v524 = vpop.f32.mrb[0].mxu0
          %525 = vmatprep.mubr.bf16.mxu0 %v342
          %526 = vmatmul.mubr.bf16.gmra.mrb[0].mxu0 %v341
          %v527 = vpop.f32.mrb[0].mxu0
          %v528 = vadd.f32 0.0, %v527
          %v529 = vpop.f32.mrb[0].mxu0
          %v530 = vpop.f32.mrb[0].mxu0
          %v531 = vadd.f32 0.0, %v530
          %v532 = vpop.f32.mrb[0].mxu0
          %533 = vmatprep.mubr.bf16.mxu0 %v344
          %534 = vmatmul.mubr.bf16.gmra.mrb[0].mxu0 %v343
          %v535 = vpop.f32.mrb[0].mxu0
          %v536 = vadd.f32 0.0, %v535
          %v537 = vpop.f32.mrb[0].mxu0
          %v538 = vpop.f32.mrb[0].mxu0
          %v539 = vadd.f32 0.0, %v538
          %v540 = vpop.f32.mrb[0].mxu0
          %541 = vmatprep.mubr.bf16.mxu0 %v346
          %542 = vmatmul.mubr.bf16.gmra.mrb[0].mxu0 %v345
          %v543 = vpop.f32.mrb[0].mxu0
          %v544 = vadd.f32 0.0, %v543
          %v545 = vpop.f32.mrb[0].mxu0
          %v546 = vpop.f32.mrb[0].mxu0
          %v547 = vadd.f32 0.0, %v546
          %v548 = vpop.f32.mrb[0].mxu0
          %549 = vmatprep.mubr.bf16.mxu0 %v348
          %550 = vmatmul.mubr.bf16.gmra.mrb[0].mxu0 %v347
          %v551 = vpop.f32.mrb[0].mxu0
          %v552 = vadd.f32 0.0, %v551
          %v553 = vpop.f32.mrb[0].mxu0
          %v554 = vpop.f32.mrb[0].mxu0
          %v555 = vadd.f32 0.0, %v554
          %v556 = vpop.f32.mrb[0].mxu0
          %557 = vdwg.mxu0
          %v558 = vmul.f32 %v496, 0.5
          %v559 = vmul.f32 %v499, 0.5
          %v560 = vmul.f32 %v504, 0.5
          %v561 = vmul.f32 %v507, 0.5
          %v562 = vmul.f32 %v512, 0.5
          %v563 = vmul.f32 %v515, 0.5
          %v564 = vmul.f32 %v520, 0.5
          %v565 = vmul.f32 %v523, 0.5
          %v566 = vmul.f32 %v528, 0.5
          %v567 = vmul.f32 %v531, 0.5
          %v568 = vmul.f32 %v536, 0.5
          %v569 = vmul.f32 %v539, 0.5
          %v570 = vmul.f32 %v544, 0.5
          %v571 = vmul.f32 %v547, 0.5
          %v572 = vmul.f32 %v552, 0.5
          %v573 = vmul.f32 %v555, 0.5
          %s574 = smul.addr %s198, 4
          %s575 = scalar_lea.vmem [#allocation8], %s574
          %v576 = vld [vmem:[%s575] sm:$0xf]
          %v577 = vld [vmem:[%s575 + $0x4] sm:$0xf]
          %v578 = vld [vmem:[%s575 + $0x8] sm:$0xf]
          %v579 = vld [vmem:[%s575 + $0xc] sm:$0xf]
          %v580 = vld [vmem:[%s575 + $0x10] sm:$0xf]
          %v581 = vld [vmem:[%s575 + $0x14] sm:$0xf]
          %v582 = vld [vmem:[%s575 + $0x18] sm:$0xf]
          %v583 = vld [vmem:[%s575 + $0x1c] sm:$0xf]
          %v584 = vld [vmem:[%s575 + $0x20] sm:$0xf]
          %v585 = vld [vmem:[%s575 + $0x24] sm:$0xf]
          %v586 = vld [vmem:[%s575 + $0x28] sm:$0xf]
          %v587 = vld [vmem:[%s575 + $0x2c] sm:$0xf]
          %v588 = vld [vmem:[%s575 + $0x30] sm:$0xf]
          %v589 = vld [vmem:[%s575 + $0x34] sm:$0xf]
          %v590 = vld [vmem:[%s575 + $0x38] sm:$0xf]
          %v591 = vld [vmem:[%s575 + $0x3c] sm:$0xf]
          %v592 = vunpack.c.l.bf16 %v576
          %v593 = vunpack.c.l.bf16 %v577
          %v594 = vunpack.c.l.bf16 %v578
          %v595 = vunpack.c.l.bf16 %v579
          %v596 = vunpack.c.l.bf16 %v580
          %v597 = vunpack.c.l.bf16 %v581
          %v598 = vunpack.c.l.bf16 %v582
          %v599 = vunpack.c.l.bf16 %v583
          %v600 = vunpack.c.l.bf16 %v584
          %v601 = vunpack.c.l.bf16 %v585
          %v602 = vunpack.c.l.bf16 %v586
          %v603 = vunpack.c.l.bf16 %v587
          %v604 = vunpack.c.l.bf16 %v588
          %v605 = vunpack.c.l.bf16 %v589
          %v606 = vunpack.c.l.bf16 %v590
          %v607 = vunpack.c.l.bf16 %v591
          %v608 = vmul.f32 %v592, 0.5
          %v609 = vmul.f32 %v593, 0.5
          %v610 = vmul.f32 %v594, 0.5
          %v611 = vmul.f32 %v595, 0.5
          %v612 = vmul.f32 %v596, 0.5
          %v613 = vmul.f32 %v597, 0.5
          %v614 = vmul.f32 %v598, 0.5
          %v615 = vmul.f32 %v599, 0.5
          %v616 = vmul.f32 %v600, 0.5
          %v617 = vmul.f32 %v601, 0.5
          %v618 = vmul.f32 %v602, 0.5
          %v619 = vmul.f32 %v603, 0.5
          %v620 = vmul.f32 %v604, 0.5
          %v621 = vmul.f32 %v605, 0.5
          %v622 = vmul.f32 %v606, 0.5
          %v623 = vmul.f32 %v607, 0.5
          %v624 = vadd.f32 %v558, %v608
          %v625 = vadd.f32 %v559, %v609
          %v626 = vadd.f32 %v560, %v610
          %v627 = vadd.f32 %v561, %v611
          %v628 = vadd.f32 %v562, %v612
          %v629 = vadd.f32 %v563, %v613
          %v630 = vadd.f32 %v564, %v614
          %v631 = vadd.f32 %v565, %v615
          %v632 = vadd.f32 %v566, %v616
          %v633 = vadd.f32 %v567, %v617
          %v634 = vadd.f32 %v568, %v618
          %v635 = vadd.f32 %v569, %v619
          %v636 = vadd.f32 %v570, %v620
          %v637 = vadd.f32 %v571, %v621
          %v638 = vadd.f32 %v572, %v622
          %v639 = vadd.f32 %v573, %v623
          %v640 = vpack.c.bf16 %v625, %v624
          %v641 = vpack.c.bf16 %v627, %v626
          %v642 = vpack.c.bf16 %v629, %v628
          %v643 = vpack.c.bf16 %v631, %v630
          %v644 = vpack.c.bf16 %v633, %v632
          %v645 = vpack.c.bf16 %v635, %v634
          %v646 = vpack.c.bf16 %v637, %v636
          %v647 = vpack.c.bf16 %v639, %v638
          %v664 = vunpack.c.l.b16 %v220
          %v665 = vunpack.c.l.b16 %v221
          %v666 = vunpack.c.l.b16 %v222
          %v667 = vunpack.c.l.b16 %v223
          %v668 = vunpack.c.l.b16 %v224
          %v669 = vunpack.c.l.b16 %v225
          %v670 = vunpack.c.l.b16 %v226
          %v671 = vunpack.c.l.b16 %v227
          %v672 = vunpack.c.l.b16 %v228
          %v673 = vunpack.c.l.b16 %v229
          %v674 = vunpack.c.l.b16 %v230
          %v675 = vunpack.c.l.b16 %v231
          %v676 = vunpack.c.l.b16 %v232
          %v677 = vunpack.c.l.b16 %v233
          %v678 = vunpack.c.l.b16 %v234
          %v679 = vunpack.c.l.b16 %v235
          %v680 = vpack.c.b16 %v665, %v664
          %v681 = vpack.c.b16 %v667, %v666
          %v682 = vpack.c.b16 %v669, %v668
          %v683 = vpack.c.b16 %v671, %v670
          %v684 = vpack.c.b16 %v673, %v672
          %v685 = vpack.c.b16 %v675, %v674
          %v686 = vpack.c.b16 %v677, %v676
          %v687 = vpack.c.b16 %v679, %v678
          %696 = vmatprep.subr.bf16.mxu0 0
          %697 = vmatpush1.bf16.msra.mxu0 %v680
          %698 = vmatprep.subr.bf16.mxu0 0
          %699 = vmatpush1.bf16.msra.mxu0 %v681
          %700 = vmatprep.subr.bf16.mxu0 0
          %701 = vmatpush1.bf16.msra.mxu0 %v682
          %702 = vmatprep.subr.bf16.mxu0 0
          %703 = vmatpush1.bf16.msra.mxu0 %v683
          %704 = vmatprep.subr.bf16.mxu0 0
          %705 = vmatpush1.bf16.msra.mxu0 %v684
          %706 = vmatprep.subr.bf16.mxu0 0
          %707 = vmatpush1.bf16.msra.mxu0 %v685
          %708 = vmatprep.subr.bf16.mxu0 0
          %709 = vmatpush1.bf16.msra.mxu0 %v686
          %710 = vmatprep.subr.bf16.mxu0 0
          %711 = vmatpush1.bf16.msra.mxu0 %v687
          %712 = vmatprep.subr.bf16.mxu0 0
          %713 = vmatpush1.bf16.msra.mxu0 0
          %714 = vmatprep.subr.bf16.mxu0 0
          %715 = vmatpush1.bf16.msra.mxu0 0
          %716 = vmatprep.subr.bf16.mxu0 0
          %717 = vmatpush1.bf16.msra.mxu0 0
          %718 = vmatprep.subr.bf16.mxu0 0
          %719 = vmatpush1.bf16.msra.mxu0 0
          %720 = vmatprep.subr.bf16.mxu0 0
          %721 = vmatpush1.bf16.msra.mxu0 0
          %722 = vmatprep.subr.bf16.mxu0 0
          %723 = vmatpush1.bf16.msra.mxu0 0
          %724 = vmatprep.subr.bf16.mxu0 0
          %725 = vmatpush1.bf16.msra.mxu0 0
          %726 = vmatprep.subr.bf16.mxu0 0
          %727 = vmatpush1.bf16.msra.mxu0 0
          %728 = vmatprep.mubr.bf16.mxu0 0
          %729 = vmatmul.mubr.bf16.gmra.mrb[0].mxu0 %v640
          %v730 = vpop.f32.mrb[0].mxu0
          %v731 = vadd.f32 0.0, %v730
          %v732 = vpop.f32.mrb[0].mxu0
          %v733 = vpop.f32.mrb[0].mxu0
          %v734 = vadd.f32 0.0, %v733
          %v735 = vpop.f32.mrb[0].mxu0
          %736 = vmatprep.mubr.bf16.mxu0 0
          %737 = vmatmul.mubr.bf16.gmra.mrb[0].mxu0 %v641
          %v738 = vpop.f32.mrb[0].mxu0
          %v739 = vadd.f32 0.0, %v738
          %v740 = vpop.f32.mrb[0].mxu0
          %v741 = vpop.f32.mrb[0].mxu0
          %v742 = vadd.f32 0.0, %v741
          %v743 = vpop.f32.mrb[0].mxu0
          %744 = vmatprep.mubr.bf16.mxu0 0
          %745 = vmatmul.mubr.bf16.gmra.mrb[0].mxu0 %v642
          %v746 = vpop.f32.mrb[0].mxu0
          %v747 = vadd.f32 0.0, %v746
          %v748 = vpop.f32.mrb[0].mxu0
          %v749 = vpop.f32.mrb[0].mxu0
          %v750 = vadd.f32 0.0, %v749
          %v751 = vpop.f32.mrb[0].mxu0
          %752 = vmatprep.mubr.bf16.mxu0 0
          %753 = vmatmul.mubr.bf16.gmra.mrb[0].mxu0 %v643
          %v754 = vpop.f32.mrb[0].mxu0
          %v755 = vadd.f32 0.0, %v754
          %v756 = vpop.f32.mrb[0].mxu0
          %v757 = vpop.f32.mrb[0].mxu0
          %v758 = vadd.f32 0.0, %v757
          %v759 = vpop.f32.mrb[0].mxu0
          %760 = vmatprep.mubr.bf16.mxu0 0
          %761 = vmatmul.mubr.bf16.gmra.mrb[0].mxu0 %v644
          %v762 = vpop.f32.mrb[0].mxu0
          %v763 = vadd.f32 0.0, %v762
          %v764 = vpop.f32.mrb[0].mxu0
          %v765 = vpop.f32.mrb[0].mxu0
          %v766 = vadd.f32 0.0, %v765
          %v767 = vpop.f32.mrb[0].mxu0
          %768 = vmatprep.mubr.bf16.mxu0 0
          %769 = vmatmul.mubr.bf16.gmra.mrb[0].mxu0 %v645
          %v770 = vpop.f32.mrb[0].mxu0
          %v771 = vadd.f32 0.0, %v770
          %v772 = vpop.f32.mrb[0].mxu0
          %v773 = vpop.f32.mrb[0].mxu0
          %v774 = vadd.f32 0.0, %v773
          %v775 = vpop.f32.mrb[0].mxu0
          %776 = vmatprep.mubr.bf16.mxu0 0
          %777 = vmatmul.mubr.bf16.gmra.mrb[0].mxu0 %v646
          %v778 = vpop.f32.mrb[0].mxu0
          %v779 = vadd.f32 0.0, %v778
          %v780 = vpop.f32.mrb[0].mxu0
          %v781 = vpop.f32.mrb[0].mxu0
          %v782 = vadd.f32 0.0, %v781
          %v783 = vpop.f32.mrb[0].mxu0
          %784 = vmatprep.mubr.bf16.mxu0 0
          %785 = vmatmul.mubr.bf16.gmra.mrb[0].mxu0 %v647
          %v786 = vpop.f32.mrb[0].mxu0
          %v787 = vadd.f32 0.0, %v786
          %v788 = vpop.f32.mrb[0].mxu0
          %v789 = vpop.f32.mrb[0].mxu0
          %v790 = vadd.f32 0.0, %v789
          %v791 = vpop.f32.mrb[0].mxu0
          %792 = vdwg.mxu0
          %s793 = ssub.f32 1.0, %s219
          %v794 = vstv %s793
          %v795 = vmul.f32 %v794, %v624
          %v796 = vmul.f32 %v794, %v625
          %v797 = vmul.f32 %v794, %v626
          %v798 = vmul.f32 %v794, %v627
          %v799 = vmul.f32 %v794, %v628
          %v800 = vmul.f32 %v794, %v629
          %v801 = vmul.f32 %v794, %v630
          %v802 = vmul.f32 %v794, %v631
          %v803 = vmul.f32 %v794, %v632
          %v804 = vmul.f32 %v794, %v633
          %v805 = vmul.f32 %v794, %v634
          %v806 = vmul.f32 %v794, %v635
          %v807 = vmul.f32 %v794, %v636
          %v808 = vmul.f32 %v794, %v637
          %v809 = vmul.f32 %v794, %v638
          %v810 = vmul.f32 %v794, %v639
          %v811 = vstv %s219
          %v812 = vmul.f32 %v811, %v731
          %v813 = vmul.f32 %v811, %v734
          %v814 = vmul.f32 %v811, %v739
          %v815 = vmul.f32 %v811, %v742
          %v816 = vmul.f32 %v811, %v747
          %v817 = vmul.f32 %v811, %v750
          %v818 = vmul.f32 %v811, %v755
          %v819 = vmul.f32 %v811, %v758
          %v820 = vmul.f32 %v811, %v763
          %v821 = vmul.f32 %v811, %v766
          %v822 = vmul.f32 %v811, %v771
          %v823 = vmul.f32 %v811, %v774
          %v824 = vmul.f32 %v811, %v779
          %v825 = vmul.f32 %v811, %v782
          %v826 = vmul.f32 %v811, %v787
          %v827 = vmul.f32 %v811, %v790
          %v828 = vadd.f32 %v795, %v812
          %v829 = vadd.f32 %v796, %v813
          %v830 = vadd.f32 %v797, %v814
          %v831 = vadd.f32 %v798, %v815
          %v832 = vadd.f32 %v799, %v816
          %v833 = vadd.f32 %v800, %v817
          %v834 = vadd.f32 %v801, %v818
          %v835 = vadd.f32 %v802, %v819
          %v836 = vadd.f32 %v803, %v820
          %v837 = vadd.f32 %v804, %v821
          %v838 = vadd.f32 %v805, %v822
          %v839 = vadd.f32 %v806, %v823
          %v840 = vadd.f32 %v807, %v824
          %v841 = vadd.f32 %v808, %v825
          %v842 = vadd.f32 %v809, %v826
          %v843 = vadd.f32 %v810, %v827
          %v844 = vadd.f32 %v828, %v592
          %v845 = vadd.f32 %v829, %v593
          %v846 = vadd.f32 %v830, %v594
          %v847 = vadd.f32 %v831, %v595
          %v848 = vadd.f32 %v832, %v596
          %v849 = vadd.f32 %v833, %v597
          %v850 = vadd.f32 %v834, %v598
          %v851 = vadd.f32 %v835, %v599
          %v852 = vadd.f32 %v836, %v600
          %v853 = vadd.f32 %v837, %v601
          %v854 = vadd.f32 %v838, %v602
          %v855 = vadd.f32 %v839, %v603
          %v856 = vadd.f32 %v840, %v604
          %v857 = vadd.f32 %v841, %v605
          %v858 = vadd.f32 %v842, %v606
          %v859 = vadd.f32 %v843, %v607
          %v860 = vmax.f32 %v844, 0.0
          %v861 = vmax.f32 %v845, 0.0
          %v862 = vmax.f32 %v846, 0.0
          %v863 = vmax.f32 %v847, 0.0
          %v864 = vmax.f32 %v848, 0.0
          %v865 = vmax.f32 %v849, 0.0
          %v866 = vmax.f32 %v850, 0.0
          %v867 = vmax.f32 %v851, 0.0
          %v868 = vmax.f32 %v852, 0.0
          %v869 = vmax.f32 %v853, 0.0
          %v870 = vmax.f32 %v854, 0.0
          %v871 = vmax.f32 %v855, 0.0
          %v872 = vmax.f32 %v856, 0.0
          %v873 = vmax.f32 %v857, 0.0
          %v874 = vmax.f32 %v858, 0.0
          %v875 = vmax.f32 %v859, 0.0
          %v876 = vpack.c.bf16 %v861, %v860
          %v877 = vpack.c.bf16 %v863, %v862
          %v878 = vpack.c.bf16 %v865, %v864
          %v879 = vpack.c.bf16 %v867, %v866
          %v880 = vpack.c.bf16 %v869, %v868
          %v881 = vpack.c.bf16 %v871, %v870
          %v882 = vpack.c.bf16 %v873, %v872
          %v883 = vpack.c.bf16 %v875, %v874
          %s884 = sshra.s32 %s197, 4
          %s885 = sand.u32 %s197, 15
          %s886 = smul.u32 %s248, 16
          %s887 = sadd.s32 %s884, %s886
          %s888 = smul.addr %s887, 8
          %s889 = scalar_lea.vmem [#allocation2], %s888
          %890 = vst [vmem:[%s889] sm:$0xff] %v876
          %891 = vst [vmem:[%s889 + $0x8] sm:$0xff] %v877
          %892 = vst [vmem:[%s889 + $0x10] sm:$0xff] %v878
          %893 = vst [vmem:[%s889 + $0x18] sm:$0xff] %v879
          %894 = vst [vmem:[%s889 + $0x20] sm:$0xff] %v880
          %895 = vst [vmem:[%s889 + $0x28] sm:$0xff] %v881
          %896 = vst [vmem:[%s889 + $0x30] sm:$0xff] %v882
          %897 = vst [vmem:[%s889 + $0x38] sm:$0xff] %v883
        $region56: #{net_forward.4} parent=35 // pred_fallthru
          _
        %p898 = scmp.gt.s32.totalorder %s21, 0
        // Predicated region
        $region57: #{net_forward.4} parent=35 // pred_check
          %p899 = pneg %p898
        $region58: #{net_forward.4} parent=35 // pred_check_branch
          %901 = sbr.rel (%p899) target = $region60
        $region59: #{net_forward.4} parent=35 // pred_region
          %p902 = scmp.lt.s32.totalorder %s21, 0
          %s903 = ssub.s32 0, %s21
          %s904 = scalar_select %p902, %s903, %s21
          %s905 = sand.u32 %s904, 1
          %s906 = ssub.s32 0, %s905
          %s907 = scalar_select %p902, %s906, %s905
          %p908 = scmp.ne.s32.totalorder %s907, 0
          %p909 = scmp.lt.s32.totalorder %s907, 0
          %p910 = pnand %p909, %p908
          %p911 = pneg %p910
          %s912 = sadd.s32 %s907, 2
          %s913 = scalar_select %p911, %s912, %s907
          %s914 = smul.u32 %s913, 16
          %s915 = smul.addr %s914, 8
          %s916 = scalar_lea.vmem [#allocation2], %s915
          %v917 = vld [vmem:[%s916] sm:$0xff]
          %v918 = vld [vmem:[%s916 + $0x8] sm:$0xff]
          %v919 = vld [vmem:[%s916 + $0x10] sm:$0xff]
          %v920 = vld [vmem:[%s916 + $0x18] sm:$0xff]
          %v921 = vld [vmem:[%s916 + $0x20] sm:$0xff]
          %v922 = vld [vmem:[%s916 + $0x28] sm:$0xff]
          %v923 = vld [vmem:[%s916 + $0x30] sm:$0xff]
          %v924 = vld [vmem:[%s916 + $0x38] sm:$0xff]
          %v925 = vld [vmem:[%s916 + $0x40] sm:$0xff]
          %v926 = vld [vmem:[%s916 + $0x48] sm:$0xff]
          %v927 = vld [vmem:[%s916 + $0x50] sm:$0xff]
          %v928 = vld [vmem:[%s916 + $0x58] sm:$0xff]
          %v929 = vld [vmem:[%s916 + $0x60] sm:$0xff]
          %v930 = vld [vmem:[%s916 + $0x68] sm:$0xff]
          %v931 = vld [vmem:[%s916 + $0x70] sm:$0xff]
          %v932 = vld [vmem:[%s916 + $0x78] sm:$0xff]
          %v949 = vunpack.c.l.b16 %v203
          %v950 = vunpack.c.h.b16 %v203
          %v951 = vunpack.c.l.b16 %v204
          %v952 = vunpack.c.h.b16 %v204
          %v953 = vunpack.c.l.b16 %v205
          %v954 = vunpack.c.h.b16 %v205
          %v955 = vunpack.c.l.b16 %v206
          %v956 = vunpack.c.h.b16 %v206
          %v957 = vunpack.c.l.b16 %v207
          %v958 = vunpack.c.h.b16 %v207
          %v959 = vunpack.c.l.b16 %v208
          %v960 = vunpack.c.h.b16 %v208
          %v961 = vunpack.c.l.b16 %v209
          %v962 = vunpack.c.h.b16 %v209
          %v963 = vunpack.c.l.b16 %v210
          %v964 = vunpack.c.h.b16 %v210
          %v965 = vunpack.c.l.b16 %v211
          %v966 = vunpack.c.h.b16 %v211
          %v967 = vunpack.c.l.b16 %v212
          %v968 = vunpack.c.h.b16 %v212
          %v969 = vunpack.c.l.b16 %v213
          %v970 = vunpack.c.h.b16 %v213
          %v971 = vunpack.c.l.b16 %v214
          %v972 = vunpack.c.h.b16 %v214
          %v973 = vunpack.c.l.b16 %v215
          %v974 = vunpack.c.h.b16 %v215
          %v975 = vunpack.c.l.b16 %v216
          %v976 = vunpack.c.h.b16 %v216
          %v977 = vunpack.c.l.b16 %v217
          %v978 = vunpack.c.h.b16 %v217
          %v979 = vunpack.c.l.b16 %v218
          %v980 = vunpack.c.h.b16 %v218
          %v981 = vpack.c.b16 %v951, %v949
          %v982 = vpack.c.b16 %v952, %v950
          %v983 = vpack.c.b16 %v955, %v953
          %v984 = vpack.c.b16 %v956, %v954
          %v985 = vpack.c.b16 %v959, %v957
          %v986 = vpack.c.b16 %v960, %v958
          %v987 = vpack.c.b16 %v963, %v961
          %v988 = vpack.c.b16 %v964, %v962
          %v989 = vpack.c.b16 %v967, %v965
          %v990 = vpack.c.b16 %v968, %v966
          %v991 = vpack.c.b16 %v971, %v969
          %v992 = vpack.c.b16 %v972, %v970
          %v993 = vpack.c.b16 %v975, %v973
          %v994 = vpack.c.b16 %v976, %v974
          %v995 = vpack.c.b16 %v979, %v977
          %v996 = vpack.c.b16 %v980, %v978
          %1013 = vmatprep.subr.bf16.mxu0 0
          %1014 = vmatpush1.bf16.msra.mxu0 %v917
          %1015 = vmatprep.subr.bf16.mxu0 0
          %1016 = vmatpush1.bf16.msra.mxu0 %v918
          %1017 = vmatprep.subr.bf16.mxu0 0
          %1018 = vmatpush1.bf16.msra.mxu0 %v919
          %1019 = vmatprep.subr.bf16.mxu0 0
          %1020 = vmatpush1.bf16.msra.mxu0 %v920
          %1021 = vmatprep.subr.bf16.mxu0 0
          %1022 = vmatpush1.bf16.msra.mxu0 %v921
          %1023 = vmatprep.subr.bf16.mxu0 0
          %1024 = vmatpush1.bf16.msra.mxu0 %v922
          %1025 = vmatprep.subr.bf16.mxu0 0
          %1026 = vmatpush1.bf16.msra.mxu0 %v923
          %1027 = vmatprep.subr.bf16.mxu0 0
          %1028 = vmatpush1.bf16.msra.mxu0 %v924
          %1029 = vmatprep.subr.bf16.mxu0 0
          %1030 = vmatpush1.bf16.msra.mxu0 %v925
          %1031 = vmatprep.subr.bf16.mxu0 0
          %1032 = vmatpush1.bf16.msra.mxu0 %v926
          %1033 = vmatprep.subr.bf16.mxu0 0
          %1034 = vmatpush1.bf16.msra.mxu0 %v927
          %1035 = vmatprep.subr.bf16.mxu0 0
          %1036 = vmatpush1.bf16.msra.mxu0 %v928
          %1037 = vmatprep.subr.bf16.mxu0 0
          %1038 = vmatpush1.bf16.msra.mxu0 %v929
          %1039 = vmatprep.subr.bf16.mxu0 0
          %1040 = vmatpush1.bf16.msra.mxu0 %v930
          %1041 = vmatprep.subr.bf16.mxu0 0
          %1042 = vmatpush1.bf16.msra.mxu0 %v931
          %1043 = vmatprep.subr.bf16.mxu0 0
          %1044 = vmatpush1.bf16.msra.mxu0 %v932
          %1045 = vmatprep.mubr.bf16.mxu0 %v982
          %1046 = vmatmul.mubr.bf16.gmra.mrb[0].mxu0 %v981
          %v1047 = vpop.f32.mrb[0].mxu0
          %v1048 = vadd.f32 0.0, %v1047
          %v1049 = vpop.f32.mrb[0].mxu0
          %v1050 = vpop.f32.mrb[0].mxu0
          %v1051 = vadd.f32 0.0, %v1050
          %v1052 = vpop.f32.mrb[0].mxu0
          %1053 = vmatprep.mubr.bf16.mxu0 %v984
          %1054 = vmatmul.mubr.bf16.gmra.mrb[0].mxu0 %v983
          %v1055 = vpop.f32.mrb[0].mxu0
          %v1056 = vadd.f32 0.0, %v1055
          %v1057 = vpop.f32.mrb[0].mxu0
          %v1058 = vpop.f32.mrb[0].mxu0
          %v1059 = vadd.f32 0.0, %v1058
          %v1060 = vpop.f32.mrb[0].mxu0
          %1061 = vmatprep.mubr.bf16.mxu0 %v986
          %1062 = vmatmul.mubr.bf16.gmra.mrb[0].mxu0 %v985
          %v1063 = vpop.f32.mrb[0].mxu0
          %v1064 = vadd.f32 0.0, %v1063
          %v1065 = vpop.f32.mrb[0].mxu0
          %v1066 = vpop.f32.mrb[0].mxu0
          %v1067 = vadd.f32 0.0, %v1066
          %v1068 = vpop.f32.mrb[0].mxu0
          %1069 = vmatprep.mubr.bf16.mxu0 %v988
          %1070 = vmatmul.mubr.bf16.gmra.mrb[0].mxu0 %v987
          %v1071 = vpop.f32.mrb[0].mxu0
          %v1072 = vadd.f32 0.0, %v1071
          %v1073 = vpop.f32.mrb[0].mxu0
          %v1074 = vpop.f32.mrb[0].mxu0
          %v1075 = vadd.f32 0.0, %v1074
          %v1076 = vpop.f32.mrb[0].mxu0
          %1077 = vmatprep.mubr.bf16.mxu0 %v990
          %1078 = vmatmul.mubr.bf16.gmra.mrb[0].mxu0 %v989
          %v1079 = vpop.f32.mrb[0].mxu0
          %v1080 = vadd.f32 0.0, %v1079
          %v1081 = vpop.f32.mrb[0].mxu0
          %v1082 = vpop.f32.mrb[0].mxu0
          %v1083 = vadd.f32 0.0, %v1082
          %v1084 = vpop.f32.mrb[0].mxu0
          %1085 = vmatprep.mubr.bf16.mxu0 %v992
          %1086 = vmatmul.mubr.bf16.gmra.mrb[0].mxu0 %v991
          %v1087 = vpop.f32.mrb[0].mxu0
          %v1088 = vadd.f32 0.0, %v1087
          %v1089 = vpop.f32.mrb[0].mxu0
          %v1090 = vpop.f32.mrb[0].mxu0
          %v1091 = vadd.f32 0.0, %v1090
          %v1092 = vpop.f32.mrb[0].mxu0
          %1093 = vmatprep.mubr.bf16.mxu0 %v994
          %1094 = vmatmul.mubr.bf16.gmra.mrb[0].mxu0 %v993
          %v1095 = vpop.f32.mrb[0].mxu0
          %v1096 = vadd.f32 0.0, %v1095
          %v1097 = vpop.f32.mrb[0].mxu0
          %v1098 = vpop.f32.mrb[0].mxu0
          %v1099 = vadd.f32 0.0, %v1098
          %v1100 = vpop.f32.mrb[0].mxu0
          %1101 = vmatprep.mubr.bf16.mxu0 %v996
          %1102 = vmatmul.mubr.bf16.gmra.mrb[0].mxu0 %v995
          %v1103 = vpop.f32.mrb[0].mxu0
          %v1104 = vadd.f32 0.0, %v1103
          %v1105 = vpop.f32.mrb[0].mxu0
          %v1106 = vpop.f32.mrb[0].mxu0
          %v1107 = vadd.f32 0.0, %v1106
          %v1108 = vpop.f32.mrb[0].mxu0
          %1109 = vdwg.mxu0
          %v1110 = vmul.f32 %v1048, 0.5
          %v1111 = vmul.f32 %v1051, 0.5
          %v1112 = vmul.f32 %v1056, 0.5
          %v1113 = vmul.f32 %v1059, 0.5
          %v1114 = vmul.f32 %v1064, 0.5
          %v1115 = vmul.f32 %v1067, 0.5
          %v1116 = vmul.f32 %v1072, 0.5
          %v1117 = vmul.f32 %v1075, 0.5
          %v1118 = vmul.f32 %v1080, 0.5
          %v1119 = vmul.f32 %v1083, 0.5
          %v1120 = vmul.f32 %v1088, 0.5
          %v1121 = vmul.f32 %v1091, 0.5
          %v1122 = vmul.f32 %v1096, 0.5
          %v1123 = vmul.f32 %v1099, 0.5
          %v1124 = vmul.f32 %v1104, 0.5
          %v1125 = vmul.f32 %v1107, 0.5
          %s1126 = smul.addr %s198, 4
          %s1127 = scalar_lea.vmem [#allocation8], %s1126
          %v1128 = vld [vmem:[%s1127] sm:$0xf]
          %v1129 = vld [vmem:[%s1127 + $0x4] sm:$0xf]
          %v1130 = vld [vmem:[%s1127 + $0x8] sm:$0xf]
          %v1131 = vld [vmem:[%s1127 + $0xc] sm:$0xf]
          %v1132 = vld [vmem:[%s1127 + $0x10] sm:$0xf]
          %v1133 = vld [vmem:[%s1127 + $0x14] sm:$0xf]
          %v1134 = vld [vmem:[%s1127 + $0x18] sm:$0xf]
          %v1135 = vld [vmem:[%s1127 + $0x1c] sm:$0xf]
          %v1136 = vld [vmem:[%s1127 + $0x20] sm:$0xf]
          %v1137 = vld [vmem:[%s1127 + $0x24] sm:$0xf]
          %v1138 = vld [vmem:[%s1127 + $0x28] sm:$0xf]
          %v1139 = vld [vmem:[%s1127 + $0x2c] sm:$0xf]
          %v1140 = vld [vmem:[%s1127 + $0x30] sm:$0xf]
          %v1141 = vld [vmem:[%s1127 + $0x34] sm:$0xf]
          %v1142 = vld [vmem:[%s1127 + $0x38] sm:$0xf]
          %v1143 = vld [vmem:[%s1127 + $0x3c] sm:$0xf]
          %v1144 = vunpack.c.l.bf16 %v1128
          %v1145 = vunpack.c.l.bf16 %v1129
          %v1146 = vunpack.c.l.bf16 %v1130
          %v1147 = vunpack.c.l.bf16 %v1131
          %v1148 = vunpack.c.l.bf16 %v1132
          %v1149 = vunpack.c.l.bf16 %v1133
          %v1150 = vunpack.c.l.bf16 %v1134
          %v1151 = vunpack.c.l.bf16 %v1135
          %v1152 = vunpack.c.l.bf16 %v1136
          %v1153 = vunpack.c.l.bf16 %v1137
          %v1154 = vunpack.c.l.bf16 %v1138
          %v1155 = vunpack.c.l.bf16 %v1139
          %v1156 = vunpack.c.l.bf16 %v1140
          %v1157 = vunpack.c.l.bf16 %v1141
          %v1158 = vunpack.c.l.bf16 %v1142
          %v1159 = vunpack.c.l.bf16 %v1143
          %v1160 = vmul.f32 %v1144, 0.5
          %v1161 = vmul.f32 %v1145, 0.5
          %v1162 = vmul.f32 %v1146, 0.5
          %v1163 = vmul.f32 %v1147, 0.5
          %v1164 = vmul.f32 %v1148, 0.5
          %v1165 = vmul.f32 %v1149, 0.5
          %v1166 = vmul.f32 %v1150, 0.5
          %v1167 = vmul.f32 %v1151, 0.5
          %v1168 = vmul.f32 %v1152, 0.5
          %v1169 = vmul.f32 %v1153, 0.5
          %v1170 = vmul.f32 %v1154, 0.5
          %v1171 = vmul.f32 %v1155, 0.5
          %v1172 = vmul.f32 %v1156, 0.5
          %v1173 = vmul.f32 %v1157, 0.5
          %v1174 = vmul.f32 %v1158, 0.5
          %v1175 = vmul.f32 %v1159, 0.5
          %v1176 = vadd.f32 %v1110, %v1160
          %v1177 = vadd.f32 %v1111, %v1161
          %v1178 = vadd.f32 %v1112, %v1162
          %v1179 = vadd.f32 %v1113, %v1163
          %v1180 = vadd.f32 %v1114, %v1164
          %v1181 = vadd.f32 %v1115, %v1165
          %v1182 = vadd.f32 %v1116, %v1166
          %v1183 = vadd.f32 %v1117, %v1167
          %v1184 = vadd.f32 %v1118, %v1168
          %v1185 = vadd.f32 %v1119, %v1169
          %v1186 = vadd.f32 %v1120, %v1170
          %v1187 = vadd.f32 %v1121, %v1171
          %v1188 = vadd.f32 %v1122, %v1172
          %v1189 = vadd.f32 %v1123, %v1173
          %v1190 = vadd.f32 %v1124, %v1174
          %v1191 = vadd.f32 %v1125, %v1175
          %v1192 = vpack.c.bf16 %v1177, %v1176
          %v1193 = vpack.c.bf16 %v1179, %v1178
          %v1194 = vpack.c.bf16 %v1181, %v1180
          %v1195 = vpack.c.bf16 %v1183, %v1182
          %v1196 = vpack.c.bf16 %v1185, %v1184
          %v1197 = vpack.c.bf16 %v1187, %v1186
          %v1198 = vpack.c.bf16 %v1189, %v1188
          %v1199 = vpack.c.bf16 %v1191, %v1190
          %v1216 = vunpack.c.l.b16 %v220
          %v1217 = vunpack.c.l.b16 %v221
          %v1218 = vunpack.c.l.b16 %v222
          %v1219 = vunpack.c.l.b16 %v223
          %v1220 = vunpack.c.l.b16 %v224
          %v1221 = vunpack.c.l.b16 %v225
          %v1222 = vunpack.c.l.b16 %v226
          %v1223 = vunpack.c.l.b16 %v227
          %v1224 = vunpack.c.l.b16 %v228
          %v1225 = vunpack.c.l.b16 %v229
          %v1226 = vunpack.c.l.b16 %v230
          %v1227 = vunpack.c.l.b16 %v231
          %v1228 = vunpack.c.l.b16 %v232
          %v1229 = vunpack.c.l.b16 %v233
          %v1230 = vunpack.c.l.b16 %v234
          %v1231 = vunpack.c.l.b16 %v235
          %v1232 = vpack.c.b16 %v1217, %v1216
          %v1233 = vpack.c.b16 %v1219, %v1218
          %v1234 = vpack.c.b16 %v1221, %v1220
          %v1235 = vpack.c.b16 %v1223, %v1222
          %v1236 = vpack.c.b16 %v1225, %v1224
          %v1237 = vpack.c.b16 %v1227, %v1226
          %v1238 = vpack.c.b16 %v1229, %v1228
          %v1239 = vpack.c.b16 %v1231, %v1230
          %1248 = vmatprep.subr.bf16.mxu0 0
          %1249 = vmatpush1.bf16.msra.mxu0 %v1232
          %1250 = vmatprep.subr.bf16.mxu0 0
          %1251 = vmatpush1.bf16.msra.mxu0 %v1233
          %1252 = vmatprep.subr.bf16.mxu0 0
          %1253 = vmatpush1.bf16.msra.mxu0 %v1234
          %1254 = vmatprep.subr.bf16.mxu0 0
          %1255 = vmatpush1.bf16.msra.mxu0 %v1235
          %1256 = vmatprep.subr.bf16.mxu0 0
          %1257 = vmatpush1.bf16.msra.mxu0 %v1236
          %1258 = vmatprep.subr.bf16.mxu0 0
          %1259 = vmatpush1.bf16.msra.mxu0 %v1237
          %1260 = vmatprep.subr.bf16.mxu0 0
          %1261 = vmatpush1.bf16.msra.mxu0 %v1238
          %1262 = vmatprep.subr.bf16.mxu0 0
          %1263 = vmatpush1.bf16.msra.mxu0 %v1239
          %1264 = vmatprep.subr.bf16.mxu0 0
          %1265 = vmatpush1.bf16.msra.mxu0 0
          %1266 = vmatprep.subr.bf16.mxu0 0
          %1267 = vmatpush1.bf16.msra.mxu0 0
          %1268 = vmatprep.subr.bf16.mxu0 0
          %1269 = vmatpush1.bf16.msra.mxu0 0
          %1270 = vmatprep.subr.bf16.mxu0 0
          %1271 = vmatpush1.bf16.msra.mxu0 0
          %1272 = vmatprep.subr.bf16.mxu0 0
          %1273 = vmatpush1.bf16.msra.mxu0 0
          %1274 = vmatprep.subr.bf16.mxu0 0
          %1275 = vmatpush1.bf16.msra.mxu0 0
          %1276 = vmatprep.subr.bf16.mxu0 0
          %1277 = vmatpush1.bf16.msra.mxu0 0
          %1278 = vmatprep.subr.bf16.mxu0 0
          %1279 = vmatpush1.bf16.msra.mxu0 0
          %1280 = vmatprep.mubr.bf16.mxu0 0
          %1281 = vmatmul.mubr.bf16.gmra.mrb[0].mxu0 %v1192
          %v1282 = vpop.f32.mrb[0].mxu0
          %v1283 = vadd.f32 0.0, %v1282
          %v1284 = vpop.f32.mrb[0].mxu0
          %v1285 = vpop.f32.mrb[0].mxu0
          %v1286 = vadd.f32 0.0, %v1285
          %v1287 = vpop.f32.mrb[0].mxu0
          %1288 = vmatprep.mubr.bf16.mxu0 0
          %1289 = vmatmul.mubr.bf16.gmra.mrb[0].mxu0 %v1193
          %v1290 = vpop.f32.mrb[0].mxu0
          %v1291 = vadd.f32 0.0, %v1290
          %v1292 = vpop.f32.mrb[0].mxu0
          %v1293 = vpop.f32.mrb[0].mxu0
          %v1294 = vadd.f32 0.0, %v1293
          %v1295 = vpop.f32.mrb[0].mxu0
          %1296 = vmatprep.mubr.bf16.mxu0 0
          %1297 = vmatmul.mubr.bf16.gmra.mrb[0].mxu0 %v1194
          %v1298 = vpop.f32.mrb[0].mxu0
          %v1299 = vadd.f32 0.0, %v1298
          %v1300 = vpop.f32.mrb[0].mxu0
          %v1301 = vpop.f32.mrb[0].mxu0
          %v1302 = vadd.f32 0.0, %v1301
          %v1303 = vpop.f32.mrb[0].mxu0
          %1304 = vmatprep.mubr.bf16.mxu0 0
          %1305 = vmatmul.mubr.bf16.gmra.mrb[0].mxu0 %v1195
          %v1306 = vpop.f32.mrb[0].mxu0
          %v1307 = vadd.f32 0.0, %v1306
          %v1308 = vpop.f32.mrb[0].mxu0
          %v1309 = vpop.f32.mrb[0].mxu0
          %v1310 = vadd.f32 0.0, %v1309
          %v1311 = vpop.f32.mrb[0].mxu0
          %1312 = vmatprep.mubr.bf16.mxu0 0
          %1313 = vmatmul.mubr.bf16.gmra.mrb[0].mxu0 %v1196
          %v1314 = vpop.f32.mrb[0].mxu0
          %v1315 = vadd.f32 0.0, %v1314
          %v1316 = vpop.f32.mrb[0].mxu0
          %v1317 = vpop.f32.mrb[0].mxu0
          %v1318 = vadd.f32 0.0, %v1317
          %v1319 = vpop.f32.mrb[0].mxu0
          %1320 = vmatprep.mubr.bf16.mxu0 0
          %1321 = vmatmul.mubr.bf16.gmra.mrb[0].mxu0 %v1197
          %v1322 = vpop.f32.mrb[0].mxu0
          %v1323 = vadd.f32 0.0, %v1322
          %v1324 = vpop.f32.mrb[0].mxu0
          %v1325 = vpop.f32.mrb[0].mxu0
          %v1326 = vadd.f32 0.0, %v1325
          %v1327 = vpop.f32.mrb[0].mxu0
          %1328 = vmatprep.mubr.bf16.mxu0 0
          %1329 = vmatmul.mubr.bf16.gmra.mrb[0].mxu0 %v1198
          %v1330 = vpop.f32.mrb[0].mxu0
          %v1331 = vadd.f32 0.0, %v1330
          %v1332 = vpop.f32.mrb[0].mxu0
          %v1333 = vpop.f32.mrb[0].mxu0
          %v1334 = vadd.f32 0.0, %v1333
          %v1335 = vpop.f32.mrb[0].mxu0
          %1336 = vmatprep.mubr.bf16.mxu0 0
          %1337 = vmatmul.mubr.bf16.gmra.mrb[0].mxu0 %v1199
          %v1338 = vpop.f32.mrb[0].mxu0
          %v1339 = vadd.f32 0.0, %v1338
          %v1340 = vpop.f32.mrb[0].mxu0
          %v1341 = vpop.f32.mrb[0].mxu0
          %v1342 = vadd.f32 0.0, %v1341
          %v1343 = vpop.f32.mrb[0].mxu0
          %1344 = vdwg.mxu0
          %s1345 = ssub.f32 1.0, %s219
          %v1346 = vstv %s1345
          %v1347 = vmul.f32 %v1346, %v1176
          %v1348 = vmul.f32 %v1346, %v1177
          %v1349 = vmul.f32 %v1346, %v1178
          %v1350 = vmul.f32 %v1346, %v1179
          %v1351 = vmul.f32 %v1346, %v1180
          %v1352 = vmul.f32 %v1346, %v1181
          %v1353 = vmul.f32 %v1346, %v1182
          %v1354 = vmul.f32 %v1346, %v1183
          %v1355 = vmul.f32 %v1346, %v1184
          %v1356 = vmul.f32 %v1346, %v1185
          %v1357 = vmul.f32 %v1346, %v1186
          %v1358 = vmul.f32 %v1346, %v1187
          %v1359 = vmul.f32 %v1346, %v1188
          %v1360 = vmul.f32 %v1346, %v1189
          %v1361 = vmul.f32 %v1346, %v1190
          %v1362 = vmul.f32 %v1346, %v1191
          %v1363 = vstv %s219
          %v1364 = vmul.f32 %v1363, %v1283
          %v1365 = vmul.f32 %v1363, %v1286
          %v1366 = vmul.f32 %v1363, %v1291
          %v1367 = vmul.f32 %v1363, %v1294
          %v1368 = vmul.f32 %v1363, %v1299
          %v1369 = vmul.f32 %v1363, %v1302
          %v1370 = vmul.f32 %v1363, %v1307
          %v1371 = vmul.f32 %v1363, %v1310
          %v1372 = vmul.f32 %v1363, %v1315
          %v1373 = vmul.f32 %v1363, %v1318
          %v1374 = vmul.f32 %v1363, %v1323
          %v1375 = vmul.f32 %v1363, %v1326
          %v1376 = vmul.f32 %v1363, %v1331
          %v1377 = vmul.f32 %v1363, %v1334
          %v1378 = vmul.f32 %v1363, %v1339
          %v1379 = vmul.f32 %v1363, %v1342
          %v1380 = vadd.f32 %v1347, %v1364
          %v1381 = vadd.f32 %v1348, %v1365
          %v1382 = vadd.f32 %v1349, %v1366
          %v1383 = vadd.f32 %v1350, %v1367
          %v1384 = vadd.f32 %v1351, %v1368
          %v1385 = vadd.f32 %v1352, %v1369
          %v1386 = vadd.f32 %v1353, %v1370
          %v1387 = vadd.f32 %v1354, %v1371
          %v1388 = vadd.f32 %v1355, %v1372
          %v1389 = vadd.f32 %v1356, %v1373
          %v1390 = vadd.f32 %v1357, %v1374
          %v1391 = vadd.f32 %v1358, %v1375
          %v1392 = vadd.f32 %v1359, %v1376
          %v1393 = vadd.f32 %v1360, %v1377
          %v1394 = vadd.f32 %v1361, %v1378
          %v1395 = vadd.f32 %v1362, %v1379
          %s1396 = sshra.s32 %s197, 4
          %s1397 = sand.u32 %s197, 15
          %s1398 = smul.addr %s1396, 8
          %s1399 = scalar_lea.vmem %s916, %s1398 [#allocation2]
          %v1400 = vld [vmem:[%s1399] sm:$0xff]
          %v1401 = vld [vmem:[%s1399 + $0x8] sm:$0xff]
          %v1402 = vld [vmem:[%s1399 + $0x10] sm:$0xff]
          %v1403 = vld [vmem:[%s1399 + $0x18] sm:$0xff]
          %v1404 = vld [vmem:[%s1399 + $0x20] sm:$0xff]
          %v1405 = vld [vmem:[%s1399 + $0x28] sm:$0xff]
          %v1406 = vld [vmem:[%s1399 + $0x30] sm:$0xff]
          %v1407 = vld [vmem:[%s1399 + $0x38] sm:$0xff]
          %v1408 = vunpack.c.l.bf16 %v1400
          %v1409 = vunpack.c.h.bf16 %v1400
          %v1410 = vunpack.c.l.bf16 %v1401
          %v1411 = vunpack.c.h.bf16 %v1401
          %v1412 = vunpack.c.l.bf16 %v1402
          %v1413 = vunpack.c.h.bf16 %v1402
          %v1414 = vunpack.c.l.bf16 %v1403
          %v1415 = vunpack.c.h.bf16 %v1403
          %v1416 = vunpack.c.l.bf16 %v1404
          %v1417 = vunpack.c.h.bf16 %v1404
          %v1418 = vunpack.c.l.bf16 %v1405
          %v1419 = vunpack.c.h.bf16 %v1405
          %v1420 = vunpack.c.l.bf16 %v1406
          %v1421 = vunpack.c.h.bf16 %v1406
          %v1422 = vunpack.c.l.bf16 %v1407
          %v1423 = vunpack.c.h.bf16 %v1407
          %v1424 = vadd.f32 %v1380, %v1408
          %v1425 = vadd.f32 %v1381, %v1409
          %v1426 = vadd.f32 %v1382, %v1410
          %v1427 = vadd.f32 %v1383, %v1411
          %v1428 = vadd.f32 %v1384, %v1412
          %v1429 = vadd.f32 %v1385, %v1413
          %v1430 = vadd.f32 %v1386, %v1414
          %v1431 = vadd.f32 %v1387, %v1415
          %v1432 = vadd.f32 %v1388, %v1416
          %v1433 = vadd.f32 %v1389, %v1417
          %v1434 = vadd.f32 %v1390, %v1418
          %v1435 = vadd.f32 %v1391, %v1419
          %v1436 = vadd.f32 %v1392, %v1420
          %v1437 = vadd.f32 %v1393, %v1421
          %v1438 = vadd.f32 %v1394, %v1422
          %v1439 = vadd.f32 %v1395, %v1423
          %v1440 = vmax.f32 %v1424, 0.0
          %v1441 = vmax.f32 %v1425, 0.0
          %v1442 = vmax.f32 %v1426, 0.0
          %v1443 = vmax.f32 %v1427, 0.0
          %v1444 = vmax.f32 %v1428, 0.0
          %v1445 = vmax.f32 %v1429, 0.0
          %v1446 = vmax.f32 %v1430, 0.0
          %v1447 = vmax.f32 %v1431, 0.0
          %v1448 = vmax.f32 %v1432, 0.0
          %v1449 = vmax.f32 %v1433, 0.0
          %v1450 = vmax.f32 %v1434, 0.0
          %v1451 = vmax.f32 %v1435, 0.0
          %v1452 = vmax.f32 %v1436, 0.0
          %v1453 = vmax.f32 %v1437, 0.0
          %v1454 = vmax.f32 %v1438, 0.0
          %v1455 = vmax.f32 %v1439, 0.0
          %v1456 = vpack.c.bf16 %v1441, %v1440
          %v1457 = vpack.c.bf16 %v1443, %v1442
          %v1458 = vpack.c.bf16 %v1445, %v1444
          %v1459 = vpack.c.bf16 %v1447, %v1446
          %v1460 = vpack.c.bf16 %v1449, %v1448
          %v1461 = vpack.c.bf16 %v1451, %v1450
          %v1462 = vpack.c.bf16 %v1453, %v1452
          %v1463 = vpack.c.bf16 %v1455, %v1454
          %s1464 = smul.u32 %s248, 16
          %s1465 = sadd.s32 %s1396, %s1464
          %s1466 = smul.addr %s1465, 8
          %s1467 = scalar_lea.vmem [#allocation2], %s1466
          %1468 = vst [vmem:[%s1467] sm:$0xff] %v1456
          %1469 = vst [vmem:[%s1467 + $0x8] sm:$0xff] %v1457
          %1470 = vst [vmem:[%s1467 + $0x10] sm:$0xff] %v1458
          %1471 = vst [vmem:[%s1467 + $0x18] sm:$0xff] %v1459
          %1472 = vst [vmem:[%s1467 + $0x20] sm:$0xff] %v1460
          %1473 = vst [vmem:[%s1467 + $0x28] sm:$0xff] %v1461
          %1474 = vst [vmem:[%s1467 + $0x30] sm:$0xff] %v1462
          %1475 = vst [vmem:[%s1467 + $0x38] sm:$0xff] %v1463
        $region60: #{net_forward.4} parent=35 // pred_fallthru
          _
        %p1476 = scmp.eq.s32.totalorder %s21, 2
        %p1477 = scmp.eq.s32.totalorder %s22, 1
        %p1478 = pnand %p1476, %p1477
        %p1479 = pneg %p1478
        // Predicated region
        $region61: #{net_forward.4} parent=35 // pred_check
          _
        $region62: #{net_forward.4} parent=35 // pred_check_branch
          %1481 = sbr.rel (%p1478) target = $region64
        $region63: #{net_forward.4} parent=35 // pred_region
          %s1482 = scalar_lea.vmem [#allocation2], 128
          // Predicated region
          $region65: #{net_forward.4} parent=63 // pred_check
            _
          $region66: #{net_forward.4} parent=63 // pred_check_branch
            %1484 = sbr.rel target = $region68
          $region67: #{net_forward.4} parent=63 // pred_region
            %1485 = sst [smem:[#allocation13]] [#allocation12]
            %1486 = sst [smem:[#allocation14]] [#allocation11]
          $region68: #{net_forward.4} parent=63 // pred_fallthru
            _
          %1488 = shalt.err (0)
          %s1490 = sshll.u32 %s1482, 4
          %s1491 = int_to_ptr.vmem [resolvable:$true] %s1490
          %1493 = dma.vmem_to_hbm [thread:$0]  %s1491, 2048, %s4, [#allocation3]
          %s1494 = smul.u32 4, 32
          %s1495 = smul.u32 %s1494, 1
          %s1496 = sshll.u32 %s1495, 4
          %1497 = dma.done [#allocation3], %s1496
        $region64: #{net_forward.4} parent=35 // pred_fallthru
          _
      $region36: #{net_forward.4} parent=5 // pred_fallthru
        _
    $region6: #{net_forward.4} parent=1 // loop_footer
      %s17 = sadd.s32 1, %s13
    $region7: #{net_forward.4} parent=1 // loop_footer_branch
      %12 = sbr.rel target = $region3
    $region8: #{net_forward.4} parent=1 // loop_exit
      _
    %1498 = vsyncpa [#allocation5], 1
    %s1499 = scalar_lea.sflag [#allocation5], 1
    %1500 = vsyncpa %s1499, 1
    %1501 = vsyncpa [#allocation9], 1
    %1502 = vsyncpa [#allocation6], 1
    %s1503 = scalar_lea.sflag [#allocation6], 1
    %1504 = vsyncpa %s1503, 1
  %1505 = vsyncmov [#allocation3]
  %s1506 = vpop.sfrf %1505
  %p1507 = scmp.eq.s32.totalorder %s1506, 0
  %p1508 = pneg %p1507
  %1510 = shalt.err (%p1508)

</llo_original>
